<compile_context>
chip_gen: v7x
topology: tpu7x:2x2x1
jax: 0.10.0
libtpu: 0.0.40
codegen_flags: <defaults>
</compile_context>

<pallas_src>
import jax
import jax.numpy as jnp
from jax.experimental import pallas as pl
from jax.experimental.pallas import tpu as pltpu


# ----------------------------------------------------------------------------
# Fused kernel: one batch row per grid step; enc1 + dec1 + enc2 + dec2.
# Refs are batch-squeezed 2-D tiles: (S, E), (T, E), (S, H), ...
# ----------------------------------------------------------------------------
def joint_kernel(len1_ref, len2_ref,                       # scalar-prefetch SMEM
                 src1e_ref, tgt1e_ref, src2e_ref, tgt2e_ref,
                 we1_ref, we2_ref, wd1_ref, wd2_ref,
                 wo1h_ref, wo1c_ref, wo2h_ref, wo2c1_ref, wo2c2_ref,
                 bias_ref,
                 dec1_ref, attn1_ref, dec2_ref, attn21_ref, attn22_ref):
    f32 = jnp.float32
    bf16 = jnp.bfloat16
    b = pl.program_id(0)

    l1 = len1_ref[b]                                       # int32 scalars (SMEM)
    l2 = len2_ref[b]

    biases = bias_ref[...]                                 # (8, H) f32, resident
    be1, be2 = biases[0:1], biases[1:2]
    bd1, bo1 = biases[2:3], biases[3:4]
    bd2, bo2 = biases[4:5], biases[5:6]

    def encode(emb_ref, w_ref, bias, length):
        # emb (S, E) bf16 -> mem (S, H), masked-mean state (1, H),
        # plus the hoisted additive attention mask for this memory bank.
        emb = emb_ref[...]
        S = emb.shape[0]
        mem = jnp.tanh(jnp.dot(emb, w_ref[...],
                               preferred_element_type=f32) + bias)        # f32
        mean_mask = (jax.lax.broadcasted_iota(jnp.int32, (S, 1), 0)
                     < length).astype(f32)                                # (S,1)
        len_f = jnp.ones((1, 1), f32) * length.astype(f32)
        inv_len = pl.reciprocal(len_f, approx=False)       # exact for the mean
        state = jnp.sum(mem * mean_mask, axis=0, keepdims=True) * inv_len
        attn_bias = jnp.where(
            jax.lax.broadcasted_iota(jnp.int32, (1, S), 1) < length,
            0.0, -1e9).astype(f32)                                        # (1,S)
        return mem.astype(bf16), state, attn_bias

    def dec_hidden(temb_ref, w_ref, bias, state):
        h = jnp.dot(temb_ref[...], w_ref[...], preferred_element_type=f32)
        return jnp.tanh(h + state + bias)                  # (T, H) f32

    def attend(h_bf, mem_bf, attn_bias):
        # bf16 MXU operands, f32 accumulation; mask/softmax stay f32.
        scores = jnp.einsum('th,sh->ts', h_bf, mem_bf,
                            preferred_element_type=f32) + attn_bias       # (T,S)
        scores = scores - jnp.max(scores, axis=-1, keepdims=True)
        e = jnp.exp(scores)
        attn = e * pl.reciprocal(jnp.sum(e, axis=-1, keepdims=True),
                                 approx=True)              # EUP vrcp
        ctx = jnp.dot(attn.astype(bf16), mem_bf, preferred_element_type=f32)
        return attn, ctx

    # --- branch 1: encoder1 + decoder1 (attends to mem1) ----------------------
    mem1_bf, st1, abias1 = encode(src1e_ref, we1_ref, be1, l1)
    h1 = dec_hidden(tgt1e_ref, wd1_ref, bd1, st1)
    h1_bf = h1.astype(bf16)
    a1, c1 = attend(h1_bf, mem1_bf, abias1)
    o1 = (jnp.dot(h1_bf, wo1h_ref[...], preferred_element_type=f32)
          + jnp.dot(c1.astype(bf16), wo1c_ref[...], preferred_element_type=f32)
          + bo1)
    dec1_ref[...] = jnp.tanh(o1).astype(dec1_ref.dtype)
    attn1_ref[...] = a1.astype(attn1_ref.dtype)

    # --- branch 2: encoder2 + decoder2 (attends to mem1 AND mem2) -------------
    # mem1 / its attention mask are reused, never recomputed or re-DMA'd.
    mem2_bf, st2, abias2 = encode(src2e_ref, we2_ref, be2, l2)
    h2 = dec_hidden(tgt2e_ref, wd2_ref, bd2, st2)
    h2_bf = h2.astype(bf16)
    a21, c21 = attend(h2_bf, mem1_bf, abias1)
    a22, c22 = attend(h2_bf, mem2_bf, abias2)
    o2 = (jnp.dot(h2_bf, wo2h_ref[...], preferred_element_type=f32)
          + jnp.dot(c21.astype(bf16), wo2c1_ref[...], preferred_element_type=f32)
          + jnp.dot(c22.astype(bf16), wo2c2_ref[...], preferred_element_type=f32)
          + bo2)
    dec2_ref[...] = jnp.tanh(o2).astype(dec2_ref.dtype)
    attn21_ref[...] = a21.astype(attn21_ref.dtype)
    attn22_ref[...] = a22.astype(attn22_ref.dtype)


def run_joint(lengths1, lengths2,
              src1e, tgt1e, src2e, tgt2e,
              we1, we2, wd1, wd2,
              wo1h, wo1c, wo2h, wo2c1, wo2c2, biases,
              *, out_dtype=jnp.float32, attn_dtype=jnp.float32):
    B, S1, _ = src1e.shape
    T1 = tgt1e.shape[1]
    S2 = src2e.shape[1]
    T2 = tgt2e.shape[1]
    H = we1.shape[1]

    # Per-batch-row activation/output tiles (batch dim squeezed out in-kernel).
    def act_spec(shape):
        _, x, y = shape
        return pl.BlockSpec((None, x, y), lambda b, l1, l2: (b, 0, 0))

    # Weights: constant index_map -> DMA'd once, stay VMEM-resident across
    # the whole batch grid (the pipeline never re-fetches an unchanged block).
    def resident(shape):
        nd = len(shape)
        return pl.BlockSpec(shape, lambda b, l1, l2, nd=nd: (0,) * nd)

    in_arrays = [src1e, tgt1e, src2e, tgt2e,
                 we1, we2, wd1, wd2, wo1h, wo1c, wo2h, wo2c1, wo2c2, biases]
    in_specs = ([act_spec(a.shape) for a in in_arrays[:4]]
                + [resident(a.shape) for a in in_arrays[4:]])

    out_shapes = (jax.ShapeDtypeStruct((B, T1, H), out_dtype),
                  jax.ShapeDtypeStruct((B, T1, S1), attn_dtype),
                  jax.ShapeDtypeStruct((B, T2, H), out_dtype),
                  jax.ShapeDtypeStruct((B, T2, S1), attn_dtype),
                  jax.ShapeDtypeStruct((B, T2, S2), attn_dtype))
    out_specs = [act_spec(s.shape) for s in out_shapes]

    # Explicit VMEM budget (review: re-derive for v7x's 64 MiB physical VMEM).
    def padded_bytes(shape, dtype):
        s = list(shape)
        if len(s) < 2:
            s = [1] * (2 - len(s)) + s
        s[-1] = pl.cdiv(s[-1], 128) * 128
        s[-2] = pl.cdiv(s[-2], 8) * 8
        n = 1
        for d in s:
            n *= d
        return n * jnp.dtype(dtype).itemsize

    per_step = sum(padded_bytes(a.shape[1:], a.dtype) for a in in_arrays[:4])
    per_step += sum(padded_bytes(s.shape[1:], s.dtype) for s in out_shapes)
    resident_b = sum(padded_bytes(a.shape, a.dtype) for a in in_arrays[4:])
    need = 2 * per_step + 2 * resident_b + (8 << 20)   # dbl-buffer + temporaries
    vmem_limit = int(min(max(need, 16 << 20), 64 << 20))

    return pl.pallas_call(
        joint_kernel,
        out_shape=out_shapes,
        grid_spec=pltpu.PrefetchScalarGridSpec(
            num_scalar_prefetch=2,          # lengths1 / lengths2 -> SMEM scalars
            grid=(B,),
            in_specs=in_specs, out_specs=out_specs),
        compiler_params=pltpu.CompilerParams(
            dimension_semantics=("parallel",),   # shard batch rows across TCs
            vmem_limit_bytes=vmem_limit),
    )(lengths1, lengths2, *in_arrays)


# ----------------------------------------------------------------------------
# JointModel forward (glue: embedding gathers, bf16 casts, weight splits).
# ----------------------------------------------------------------------------
def joint_model_forward(params, src, tmpl, src2, tgt, lengths1, lengths2):
    H = params["w_enc1"].shape[1]
    bf16 = jnp.bfloat16
    _tgt1 = tmpl[:-1]                                       # (T1-1, B)
    _tgt2 = tgt[:-1]                                        # (T2-1, B)

    # Batch-major bf16 embedding lookups (MXU operands; accumulation stays f32).
    src1e = jnp.take(params["emb_enc1"], src.T, axis=0).astype(bf16)
    tgt1e = jnp.take(params["emb_dec1"], _tgt1.T, axis=0).astype(bf16)
    src2e = jnp.take(params["emb_enc2"], src2.T, axis=0).astype(bf16)
    tgt2e = jnp.take(params["emb_dec2"], _tgt2.T, axis=0).astype(bf16)

    # bf16 matmul weights; split w_out so the kernel never concatenates
    # (recommended form for production H >= 128; see TODO for H < 128).
    we1 = params["w_enc1"].astype(bf16)
    we2 = params["w_enc2"].astype(bf16)
    wd1 = params["w_dec1"].astype(bf16)
    wd2 = params["w_dec2"].astype(bf16)
    wo1h = params["w_out1"][:H].astype(bf16)
    wo1c = params["w_out1"][H:].astype(bf16)
    wo2h = params["w_out2"][:H].astype(bf16)
    wo2c1 = params["w_out2"][H:2 * H].astype(bf16)
    wo2c2 = params["w_out2"][2 * H:].astype(bf16)

    # All biases packed into one resident f32 slab (rows 6..7 are padding).
    biases = jnp.concatenate(
        [params["b_enc1"], params["b_enc2"], params["b_dec1"], params["b_out1"],
         params["b_dec2"], params["b_out2"], jnp.zeros((2, H), jnp.float32)],
        axis=0)

    d1, a1, d2, a21, a22 = run_joint(
        lengths1.astype(jnp.int32), lengths2.astype(jnp.int32),
        src1e, tgt1e, src2e, tgt2e,
        we1, we2, wd1, wd2, wo1h, wo1c, wo2h, wo2c1, wo2c2, biases,
        out_dtype=jnp.float32, attn_dtype=jnp.float32)

    # Return OpenNMT time-major conventions: (T, B, H) / (T, B, S).
    # (Pure bandwidth tax outside the kernel — keep batch-major downstream.)
    dec1_out = jnp.transpose(d1, (1, 0, 2))
    dec2_out = jnp.transpose(d2, (1, 0, 2))
    attns1 = {"std": jnp.transpose(a1, (1, 0, 2))}
    attns2 = {"std1": jnp.transpose(a21, (1, 0, 2)),
              "std2": jnp.transpose(a22, (1, 0, 2))}
    return dec1_out, attns1, dec2_out, attns2


# ----------------------------------------------------------------------------
# Pure-JAX f32 reference (same math, time-major) for a correctness check.
# ----------------------------------------------------------------------------
def _ref_encoder(emb, lengths, w, b):
    mem = jnp.tanh(emb @ w + b)                             # (S, B, H)
    S = emb.shape[0]
    mask = (jnp.arange(S)[:, None] < lengths[None, :]).astype(jnp.float32)
    state = (jnp.sum(mem * mask[:, :, None], axis=0)
             / lengths[:, None].astype(jnp.float32))
    return state, mem


def _ref_attend(h, mem, lengths):
    scores = jnp.einsum("tbh,sbh->tbs", h, mem)
    S = mem.shape[0]
    mask = jnp.arange(S)[None, None, :] < lengths[None, :, None]
    scores = jnp.where(mask, scores, -1e9)
    scores = scores - jnp.max(scores, axis=-1, keepdims=True)
    e = jnp.exp(scores)
    attn = e / jnp.sum(e, axis=-1, keepdims=True)
    ctx = jnp.einsum("tbs,sbh->tbh", attn, mem)
    return attn, ctx


def _ref_forward(params, src, tmpl, src2, tgt, lengths1, lengths2):
    _tgt1, _tgt2 = tmpl[:-1], tgt[:-1]
    st1, mem1 = _ref_encoder(params["emb_enc1"][src], lengths1,
                             params["w_enc1"], params["b_enc1"])
    h1 = jnp.tanh(params["emb_dec1"][_tgt1] @ params["w_dec1"]
                  + st1[None] + params["b_dec1"])
    a1, c1 = _ref_attend(h1, mem1, lengths1)
    d1 = jnp.tanh(jnp.concatenate([h1, c1], -1) @ params["w_out1"]
                  + params["b_out1"])

    st2, mem2 = _ref_encoder(params["emb_enc2"][src2], lengths2,
                             params["w_enc2"], params["b_enc2"])
    h2 = jnp.tanh(params["emb_dec2"][_tgt2] @ params["w_dec2"]
                  + st2[None] + params["b_dec2"])
    a21, c21 = _ref_attend(h2, mem1, lengths1)
    a22, c22 = _ref_attend(h2, mem2, lengths2)
    d2 = jnp.tanh(jnp.concatenate([h2, c21, c22], -1) @ params["w_out2"]
                  + params["b_out2"])
    return d1, a1, d2, a21, a22


# ----------------------------------------------------------------------------
if __name__ == "__main__":
    V, E, H = 50, 32, 32
    B, S1, T1, S2, T2 = 2, 8, 6, 8, 6

    key = jax.random.PRNGKey(0)
    ks = jax.random.split(key, 20)

    def w(k, shape, scale=0.1):
        return (scale * jax.random.normal(k, shape)).astype(jnp.float32)

    params = {
        "emb_enc1": w(ks[0], (V, E)), "emb_dec1": w(ks[1], (V, E)),
        "emb_enc2": w(ks[2], (V, E)), "emb_dec2": w(ks[3], (V, E)),
        "w_enc1": w(ks[4], (E, H)), "b_enc1": w(ks[5], (1, H)),
        "w_enc2": w(ks[6], (E, H)), "b_enc2": w(ks[7], (1, H)),
        "w_dec1": w(ks[8], (E, H)), "b_dec1": w(ks[9], (1, H)),
        "w_out1": w(ks[10], (2 * H, H)), "b_out1": w(ks[11], (1, H)),
        "w_dec2": w(ks[12], (E, H)), "b_dec2": w(ks[13], (1, H)),
        "w_out2": w(ks[14], (3 * H, H)), "b_out2": w(ks[15], (1, H)),
    }

    src = jax.random.randint(ks[16], (S1, B), 0, V, dtype=jnp.int32)
    tmpl = jax.random.randint(ks[17], (T1, B), 0, V, dtype=jnp.int32)
    src2 = jax.random.randint(ks[18], (S2, B), 0, V, dtype=jnp.int32)
    tgt = jax.random.randint(ks[19], (T2, B), 0, V, dtype=jnp.int32)
    lengths1 = jnp.array([S1, S1 - 3], dtype=jnp.int32)
    lengths2 = jnp.full((B,), S2, dtype=jnp.int32)  # encoder2 called w/o lengths

    fwd = jax.jit(joint_model_forward)
    dec1_out, attns1, dec2_out, attns2 = fwd(
        params, src, tmpl, src2, tgt, lengths1, lengths2)
    jax.block_until_ready((dec1_out, attns1["std"], dec2_out,
                           attns2["std1"], attns2["std2"]))

    # Sanity check against the pure-JAX f32 reference (bf16 MXU operands ->
    # looser tolerance than the f32 path, per review).
    r1, ra1, r2, ra21, ra22 = _ref_forward(params, src, tmpl, src2, tgt,
                                           lengths1, lengths2)
    for got, want in [(dec1_out, r1), (attns1["std"], ra1), (dec2_out, r2),
                      (attns2["std1"], ra21), (attns2["std2"], ra22)]:
        assert got.shape == want.shape
        assert jnp.allclose(got, want, atol=2e-2, rtol=2e-2)

    print("KERNEL_OK")
</pallas_src>

<mosaic_0001>
module attributes {stable_mosaic.version = 11 : i64} {
  func.func @joint_kernel(%arg0: i32, %arg1: memref<2xi32, #tpu.memory_space<smem>>, %arg2: memref<2xi32, #tpu.memory_space<smem>>, %arg3: memref<1x8x32xbf16, #tpu.memory_space<vmem>>, %arg4: memref<1x5x32xbf16, #tpu.memory_space<vmem>>, %arg5: memref<1x8x32xbf16, #tpu.memory_space<vmem>>, %arg6: memref<1x5x32xbf16, #tpu.memory_space<vmem>>, %arg7: memref<32x32xbf16, #tpu.memory_space<vmem>>, %arg8: memref<32x32xbf16, #tpu.memory_space<vmem>>, %arg9: memref<32x32xbf16, #tpu.memory_space<vmem>>, %arg10: memref<32x32xbf16, #tpu.memory_space<vmem>>, %arg11: memref<32x32xbf16, #tpu.memory_space<vmem>>, %arg12: memref<32x32xbf16, #tpu.memory_space<vmem>>, %arg13: memref<32x32xbf16, #tpu.memory_space<vmem>>, %arg14: memref<32x32xbf16, #tpu.memory_space<vmem>>, %arg15: memref<32x32xbf16, #tpu.memory_space<vmem>>, %arg16: memref<8x32xf32, #tpu.memory_space<vmem>>, %arg17: memref<1x5x32xf32, #tpu.memory_space<vmem>>, %arg18: memref<1x5x8xf32, #tpu.memory_space<vmem>>, %arg19: memref<1x5x32xf32, #tpu.memory_space<vmem>>, %arg20: memref<1x5x8xf32, #tpu.memory_space<vmem>>, %arg21: memref<1x5x8xf32, #tpu.memory_space<vmem>>) attributes {dimension_semantics = [#tpu.dimension_semantics<parallel>], iteration_bounds = array<i64: 2>, scalar_prefetch = 2 : i64, scratch_operands = 0 : i64, tpu.core_type = #tpu.core_type<tc>, window_params = [{transform_indices = @transform_0, window_bounds = array<i64: 1, 8, 32>}, {transform_indices = @transform_1, window_bounds = array<i64: 1, 5, 32>}, {transform_indices = @transform_2, window_bounds = array<i64: 1, 8, 32>}, {transform_indices = @transform_3, window_bounds = array<i64: 1, 5, 32>}, {pipeline_mode = #tpu.pipeline_mode<synchronous>, transform_indices = @transform_4, window_bounds = array<i64: 32, 32>}, {pipeline_mode = #tpu.pipeline_mode<synchronous>, transform_indices = @transform_5, window_bounds = array<i64: 32, 32>}, {pipeline_mode = #tpu.pipeline_mode<synchronous>, transform_indices = @transform_6, window_bounds = array<i64: 32, 32>}, {pipeline_mode = #tpu.pipeline_mode<synchronous>, transform_indices = @transform_7, window_bounds = array<i64: 32, 32>}, {pipeline_mode = #tpu.pipeline_mode<synchronous>, transform_indices = @transform_8, window_bounds = array<i64: 32, 32>}, {pipeline_mode = #tpu.pipeline_mode<synchronous>, transform_indices = @transform_9, window_bounds = array<i64: 32, 32>}, {pipeline_mode = #tpu.pipeline_mode<synchronous>, transform_indices = @transform_10, window_bounds = array<i64: 32, 32>}, {pipeline_mode = #tpu.pipeline_mode<synchronous>, transform_indices = @transform_11, window_bounds = array<i64: 32, 32>}, {pipeline_mode = #tpu.pipeline_mode<synchronous>, transform_indices = @transform_12, window_bounds = array<i64: 32, 32>}, {pipeline_mode = #tpu.pipeline_mode<synchronous>, transform_indices = @transform_13, window_bounds = array<i64: 8, 32>}, {transform_indices = @transform_14, window_bounds = array<i64: 1, 5, 32>}, {transform_indices = @transform_15, window_bounds = array<i64: 1, 5, 8>}, {transform_indices = @transform_16, window_bounds = array<i64: 1, 5, 32>}, {transform_indices = @transform_17, window_bounds = array<i64: 1, 5, 8>}, {transform_indices = @transform_18, window_bounds = array<i64: 1, 5, 8>}]} {
    %0 = arith.index_cast %arg0 : i32 to index
    %1 = memref.load %arg1[%0] : memref<2xi32, #tpu.memory_space<smem>>
    %2 = arith.index_cast %arg0 : i32 to index
    %3 = memref.load %arg2[%2] : memref<2xi32, #tpu.memory_space<smem>>
    %c0 = arith.constant 0 : index
    %c0_0 = arith.constant 0 : index
    %4 = vector.load %arg16[%c0, %c0_0] : memref<8x32xf32, #tpu.memory_space<vmem>>, vector<8x32xf32>
    %5 = vector.extract_strided_slice %4 {offsets = [0, 0], sizes = [1, 32], strides = [1, 1]} : vector<8x32xf32> to vector<1x32xf32>
    %6 = vector.extract_strided_slice %4 {offsets = [1, 0], sizes = [1, 32], strides = [1, 1]} : vector<8x32xf32> to vector<1x32xf32>
    %7 = vector.extract_strided_slice %4 {offsets = [2, 0], sizes = [1, 32], strides = [1, 1]} : vector<8x32xf32> to vector<1x32xf32>
    %8 = vector.extract_strided_slice %4 {offsets = [3, 0], sizes = [1, 32], strides = [1, 1]} : vector<8x32xf32> to vector<1x32xf32>
    %9 = vector.extract_strided_slice %4 {offsets = [4, 0], sizes = [1, 32], strides = [1, 1]} : vector<8x32xf32> to vector<1x32xf32>
    %10 = vector.extract_strided_slice %4 {offsets = [5, 0], sizes = [1, 32], strides = [1, 1]} : vector<8x32xf32> to vector<1x32xf32>
    %c0_1 = arith.constant 0 : index
    %c0_2 = arith.constant 0 : index
    %c0_3 = arith.constant 0 : index
    %11 = vector.load %arg3[%c0_1, %c0_2, %c0_3] : memref<1x8x32xbf16, #tpu.memory_space<vmem>>, vector<1x8x32xbf16>
    %12 = vector.shape_cast %11 : vector<1x8x32xbf16> to vector<8x32xbf16>
    %c0_4 = arith.constant 0 : index
    %c0_5 = arith.constant 0 : index
    %13 = vector.load %arg7[%c0_4, %c0_5] : memref<32x32xbf16, #tpu.memory_space<vmem>>, vector<32x32xbf16>
    %cst = arith.constant dense<0.000000e+00> : vector<8x32xf32>
    %14 = tpu.matmul %12, %13, %cst {dimension_numbers = #tpu.dot_dimension_numbers<[1], [0], [0], [1], [0, 0, 1, 1], [], []>} : vector<8x32xbf16>, vector<32x32xbf16>, vector<8x32xf32> -> vector<8x32xf32>
    %15 = vector.broadcast %5 : vector<1x32xf32> to vector<8x32xf32>
    %16 = arith.addf %14, %15 : vector<8x32xf32>
    %17 = math.tanh %16 : vector<8x32xf32>
    %18 = tpu.iota {dimensions = array<i32: 0>} : vector<8x1xi32>
    %19 = vector.broadcast %1 : i32 to vector<8x1xi32>
    %20 = arith.cmpi slt, %18, %19 : vector<8x1xi32>
    %21 = arith.extui %20 : vector<8x1xi1> to vector<8x1xi32>
    %22 = arith.sitofp %21 : vector<8x1xi32> to vector<8x1xf32>
    %cst_6 = arith.constant 1.000000e+00 : f32
    %23 = vector.broadcast %cst_6 : f32 to vector<1x1xf32>
    %24 = arith.sitofp %1 : i32 to f32
    %25 = vector.broadcast %24 : f32 to vector<1x1xf32>
    %26 = arith.mulf %23, %25 : vector<1x1xf32>
    %27 = tpu.reciprocal %26 : vector<1x1xf32> -> vector<1x1xf32>
    %28 = vector.broadcast %22 : vector<8x1xf32> to vector<8x32xf32>
    %29 = arith.mulf %17, %28 : vector<8x32xf32>
    %cst_7 = arith.constant dense<0.000000e+00> : vector<32xf32>
    %30 = vector.multi_reduction <add>, %29, %cst_7 [0] : vector<8x32xf32> to vector<32xf32>
    %31 = vector.shape_cast %30 : vector<32xf32> to vector<1x32xf32>
    %32 = vector.broadcast %27 : vector<1x1xf32> to vector<1x32xf32>
    %33 = arith.mulf %31, %32 : vector<1x32xf32>
    %34 = tpu.iota {dimensions = array<i32: 1>} : vector<1x8xi32>
    %35 = vector.broadcast %1 : i32 to vector<1x8xi32>
    %36 = arith.cmpi slt, %34, %35 : vector<1x8xi32>
    %cst_8 = arith.constant 0.000000e+00 : f32
    %cst_9 = arith.constant -1.000000e+09 : f32
    %37 = vector.broadcast %cst_8 : f32 to vector<1x8xf32>
    %38 = vector.broadcast %cst_9 : f32 to vector<1x8xf32>
    %39 = arith.select %36, %37, %38 : vector<1x8xi1>, vector<1x8xf32>
    %40 = arith.truncf %17 : vector<8x32xf32> to vector<8x32xbf16>
    %c0_10 = arith.constant 0 : index
    %c0_11 = arith.constant 0 : index
    %c0_12 = arith.constant 0 : index
    %41 = vector.load %arg4[%c0_10, %c0_11, %c0_12] : memref<1x5x32xbf16, #tpu.memory_space<vmem>>, vector<1x5x32xbf16>
    %42 = vector.shape_cast %41 : vector<1x5x32xbf16> to vector<5x32xbf16>
    %c0_13 = arith.constant 0 : index
    %c0_14 = arith.constant 0 : index
    %43 = vector.load %arg9[%c0_13, %c0_14] : memref<32x32xbf16, #tpu.memory_space<vmem>>, vector<32x32xbf16>
    %cst_15 = arith.constant dense<0.000000e+00> : vector<5x32xf32>
    %44 = tpu.matmul %42, %43, %cst_15 {dimension_numbers = #tpu.dot_dimension_numbers<[1], [0], [0], [1], [0, 0, 1, 1], [], []>} : vector<5x32xbf16>, vector<32x32xbf16>, vector<5x32xf32> -> vector<5x32xf32>
    %45 = vector.broadcast %33 : vector<1x32xf32> to vector<5x32xf32>
    %46 = arith.addf %44, %45 : vector<5x32xf32>
    %47 = vector.broadcast %7 : vector<1x32xf32> to vector<5x32xf32>
    %48 = arith.addf %46, %47 : vector<5x32xf32>
    %49 = math.tanh %48 : vector<5x32xf32>
    %50 = arith.truncf %49 : vector<5x32xf32> to vector<5x32xbf16>
    "tpu.trace_start"() <{level = 10 : i32, message = "th,sh->ts"}> : () -> ()
    %cst_16 = arith.constant dense<0.000000e+00> : vector<5x8xf32>
    %51 = tpu.matmul %50, %40, %cst_16 {dimension_numbers = #tpu.dot_dimension_numbers<[1], [1], [0], [0], [0, 0, 1, 0], [], []>} : vector<5x32xbf16>, vector<8x32xbf16>, vector<5x8xf32> -> vector<5x8xf32>
    "tpu.trace_stop"() : () -> ()
    %52 = vector.broadcast %39 : vector<1x8xf32> to vector<5x8xf32>
    %53 = arith.addf %51, %52 : vector<5x8xf32>
    %cst_17 = arith.constant dense<0xFF800000> : vector<5xf32>
    %54 = vector.multi_reduction <maximumf>, %53, %cst_17 [1] : vector<5x8xf32> to vector<5xf32>
    %55 = vector.shape_cast %54 : vector<5xf32> to vector<5x1xf32>
    %56 = vector.broadcast %55 : vector<5x1xf32> to vector<5x8xf32>
    %57 = arith.subf %53, %56 : vector<5x8xf32>
    %58 = math.exp %57 : vector<5x8xf32>
    %cst_18 = arith.constant dense<0.000000e+00> : vector<5xf32>
    %59 = vector.multi_reduction <add>, %58, %cst_18 [1] : vector<5x8xf32> to vector<5xf32>
    %60 = vector.shape_cast %59 : vector<5xf32> to vector<5x1xf32>
    %61 = tpu.reciprocal %60 {approx = true} : vector<5x1xf32> -> vector<5x1xf32>
    %62 = vector.broadcast %61 : vector<5x1xf32> to vector<5x8xf32>
    %63 = arith.mulf %58, %62 : vector<5x8xf32>
    %64 = arith.truncf %63 : vector<5x8xf32> to vector<5x8xbf16>
    %cst_19 = arith.constant dense<0.000000e+00> : vector<5x32xf32>
    %65 = tpu.matmul %64, %40, %cst_19 {dimension_numbers = #tpu.dot_dimension_numbers<[1], [0], [0], [1], [0, 0, 1, 1], [], []>} : vector<5x8xbf16>, vector<8x32xbf16>, vector<5x32xf32> -> vector<5x32xf32>
    %c0_20 = arith.constant 0 : index
    %c0_21 = arith.constant 0 : index
    %66 = vector.load %arg11[%c0_20, %c0_21] : memref<32x32xbf16, #tpu.memory_space<vmem>>, vector<32x32xbf16>
    %cst_22 = arith.constant dense<0.000000e+00> : vector<5x32xf32>
    %67 = tpu.matmul %50, %66, %cst_22 {dimension_numbers = #tpu.dot_dimension_numbers<[1], [0], [0], [1], [0, 0, 1, 1], [], []>} : vector<5x32xbf16>, vector<32x32xbf16>, vector<5x32xf32> -> vector<5x32xf32>
    %68 = arith.truncf %65 : vector<5x32xf32> to vector<5x32xbf16>
    %c0_23 = arith.constant 0 : index
    %c0_24 = arith.constant 0 : index
    %69 = vector.load %arg12[%c0_23, %c0_24] : memref<32x32xbf16, #tpu.memory_space<vmem>>, vector<32x32xbf16>
    %cst_25 = arith.constant dense<0.000000e+00> : vector<5x32xf32>
    %70 = tpu.matmul %68, %69, %cst_25 {dimension_numbers = #tpu.dot_dimension_numbers<[1], [0], [0], [1], [0, 0, 1, 1], [], []>} : vector<5x32xbf16>, vector<32x32xbf16>, vector<5x32xf32> -> vector<5x32xf32>
    %71 = arith.addf %67, %70 : vector<5x32xf32>
    %72 = vector.broadcast %8 : vector<1x32xf32> to vector<5x32xf32>
    %73 = arith.addf %71, %72 : vector<5x32xf32>
    %74 = math.tanh %73 : vector<5x32xf32>
    %c0_26 = arith.constant 0 : index
    %c0_27 = arith.constant 0 : index
    %c0_28 = arith.constant 0 : index
    %75 = vector.load %arg17[%c0_26, %c0_27, %c0_28] : memref<1x5x32xf32, #tpu.memory_space<vmem>>, vector<1x5x32xf32>
    %76 = vector.shape_cast %75 : vector<1x5x32xf32> to vector<5x32xf32>
    %77 = vector.shape_cast %74 : vector<5x32xf32> to vector<1x5x32xf32>
    tpu.vector_store %arg17[%c0_26, %c0_27, %c0_28], %77 {strides = array<i32>} : memref<1x5x32xf32, #tpu.memory_space<vmem>>, vector<1x5x32xf32>,
    %c0_29 = arith.constant 0 : index
    %c0_30 = arith.constant 0 : index
    %c0_31 = arith.constant 0 : index
    %78 = vector.load %arg18[%c0_29, %c0_30, %c0_31] : memref<1x5x8xf32, #tpu.memory_space<vmem>>, vector<1x5x8xf32>
    %79 = vector.shape_cast %78 : vector<1x5x8xf32> to vector<5x8xf32>
    %80 = vector.shape_cast %63 : vector<5x8xf32> to vector<1x5x8xf32>
    tpu.vector_store %arg18[%c0_29, %c0_30, %c0_31], %80 {strides = array<i32>} : memref<1x5x8xf32, #tpu.memory_space<vmem>>, vector<1x5x8xf32>,
    %c0_32 = arith.constant 0 : index
    %c0_33 = arith.constant 0 : index
    %c0_34 = arith.constant 0 : index
    %81 = vector.load %arg5[%c0_32, %c0_33, %c0_34] : memref<1x8x32xbf16, #tpu.memory_space<vmem>>, vector<1x8x32xbf16>
    %82 = vector.shape_cast %81 : vector<1x8x32xbf16> to vector<8x32xbf16>
    %c0_35 = arith.constant 0 : index
    %c0_36 = arith.constant 0 : index
    %83 = vector.load %arg8[%c0_35, %c0_36] : memref<32x32xbf16, #tpu.memory_space<vmem>>, vector<32x32xbf16>
    %cst_37 = arith.constant dense<0.000000e+00> : vector<8x32xf32>
    %84 = tpu.matmul %82, %83, %cst_37 {dimension_numbers = #tpu.dot_dimension_numbers<[1], [0], [0], [1], [0, 0, 1, 1], [], []>} : vector<8x32xbf16>, vector<32x32xbf16>, vector<8x32xf32> -> vector<8x32xf32>
    %85 = vector.broadcast %6 : vector<1x32xf32> to vector<8x32xf32>
    %86 = arith.addf %84, %85 : vector<8x32xf32>
    %87 = math.tanh %86 : vector<8x32xf32>
    %88 = tpu.iota {dimensions = array<i32: 0>} : vector<8x1xi32>
    %89 = vector.broadcast %3 : i32 to vector<8x1xi32>
    %90 = arith.cmpi slt, %88, %89 : vector<8x1xi32>
    %91 = arith.extui %90 : vector<8x1xi1> to vector<8x1xi32>
    %92 = arith.sitofp %91 : vector<8x1xi32> to vector<8x1xf32>
    %cst_38 = arith.constant 1.000000e+00 : f32
    %93 = vector.broadcast %cst_38 : f32 to vector<1x1xf32>
    %94 = arith.sitofp %3 : i32 to f32
    %95 = vector.broadcast %94 : f32 to vector<1x1xf32>
    %96 = arith.mulf %93, %95 : vector<1x1xf32>
    %97 = tpu.reciprocal %96 : vector<1x1xf32> -> vector<1x1xf32>
    %98 = vector.broadcast %92 : vector<8x1xf32> to vector<8x32xf32>
    %99 = arith.mulf %87, %98 : vector<8x32xf32>
    %cst_39 = arith.constant dense<0.000000e+00> : vector<32xf32>
    %100 = vector.multi_reduction <add>, %99, %cst_39 [0] : vector<8x32xf32> to vector<32xf32>
    %101 = vector.shape_cast %100 : vector<32xf32> to vector<1x32xf32>
    %102 = vector.broadcast %97 : vector<1x1xf32> to vector<1x32xf32>
    %103 = arith.mulf %101, %102 : vector<1x32xf32>
    %104 = tpu.iota {dimensions = array<i32: 1>} : vector<1x8xi32>
    %105 = vector.broadcast %3 : i32 to vector<1x8xi32>
    %106 = arith.cmpi slt, %104, %105 : vector<1x8xi32>
    %cst_40 = arith.constant 0.000000e+00 : f32
    %cst_41 = arith.constant -1.000000e+09 : f32
    %107 = vector.broadcast %cst_40 : f32 to vector<1x8xf32>
    %108 = vector.broadcast %cst_41 : f32 to vector<1x8xf32>
    %109 = arith.select %106, %107, %108 : vector<1x8xi1>, vector<1x8xf32>
    %110 = arith.truncf %87 : vector<8x32xf32> to vector<8x32xbf16>
    %c0_42 = arith.constant 0 : index
    %c0_43 = arith.constant 0 : index
    %c0_44 = arith.constant 0 : index
    %111 = vector.load %arg6[%c0_42, %c0_43, %c0_44] : memref<1x5x32xbf16, #tpu.memory_space<vmem>>, vector<1x5x32xbf16>
    %112 = vector.shape_cast %111 : vector<1x5x32xbf16> to vector<5x32xbf16>
    %c0_45 = arith.constant 0 : index
    %c0_46 = arith.constant 0 : index
    %113 = vector.load %arg10[%c0_45, %c0_46] : memref<32x32xbf16, #tpu.memory_space<vmem>>, vector<32x32xbf16>
    %cst_47 = arith.constant dense<0.000000e+00> : vector<5x32xf32>
    %114 = tpu.matmul %112, %113, %cst_47 {dimension_numbers = #tpu.dot_dimension_numbers<[1], [0], [0], [1], [0, 0, 1, 1], [], []>} : vector<5x32xbf16>, vector<32x32xbf16>, vector<5x32xf32> -> vector<5x32xf32>
    %115 = vector.broadcast %103 : vector<1x32xf32> to vector<5x32xf32>
    %116 = arith.addf %114, %115 : vector<5x32xf32>
    %117 = vector.broadcast %9 : vector<1x32xf32> to vector<5x32xf32>
    %118 = arith.addf %116, %117 : vector<5x32xf32>
    %119 = math.tanh %118 : vector<5x32xf32>
    %120 = arith.truncf %119 : vector<5x32xf32> to vector<5x32xbf16>
    "tpu.trace_start"() <{level = 10 : i32, message = "th,sh->ts"}> : () -> ()
    %cst_48 = arith.constant dense<0.000000e+00> : vector<5x8xf32>
    %121 = tpu.matmul %120, %40, %cst_48 {dimension_numbers = #tpu.dot_dimension_numbers<[1], [1], [0], [0], [0, 0, 1, 0], [], []>} : vector<5x32xbf16>, vector<8x32xbf16>, vector<5x8xf32> -> vector<5x8xf32>
    "tpu.trace_stop"() : () -> ()
    %122 = vector.broadcast %39 : vector<1x8xf32> to vector<5x8xf32>
    %123 = arith.addf %121, %122 : vector<5x8xf32>
    %cst_49 = arith.constant dense<0xFF800000> : vector<5xf32>
    %124 = vector.multi_reduction <maximumf>, %123, %cst_49 [1] : vector<5x8xf32> to vector<5xf32>
    %125 = vector.shape_cast %124 : vector<5xf32> to vector<5x1xf32>
    %126 = vector.broadcast %125 : vector<5x1xf32> to vector<5x8xf32>
    %127 = arith.subf %123, %126 : vector<5x8xf32>
    %128 = math.exp %127 : vector<5x8xf32>
    %cst_50 = arith.constant dense<0.000000e+00> : vector<5xf32>
    %129 = vector.multi_reduction <add>, %128, %cst_50 [1] : vector<5x8xf32> to vector<5xf32>
    %130 = vector.shape_cast %129 : vector<5xf32> to vector<5x1xf32>
    %131 = tpu.reciprocal %130 {approx = true} : vector<5x1xf32> -> vector<5x1xf32>
    %132 = vector.broadcast %131 : vector<5x1xf32> to vector<5x8xf32>
    %133 = arith.mulf %128, %132 : vector<5x8xf32>
    %134 = arith.truncf %133 : vector<5x8xf32> to vector<5x8xbf16>
    %cst_51 = arith.constant dense<0.000000e+00> : vector<5x32xf32>
    %135 = tpu.matmul %134, %40, %cst_51 {dimension_numbers = #tpu.dot_dimension_numbers<[1], [0], [0], [1], [0, 0, 1, 1], [], []>} : vector<5x8xbf16>, vector<8x32xbf16>, vector<5x32xf32> -> vector<5x32xf32>
    "tpu.trace_start"() <{level = 10 : i32, message = "th,sh->ts"}> : () -> ()
    %cst_52 = arith.constant dense<0.000000e+00> : vector<5x8xf32>
    %136 = tpu.matmul %120, %110, %cst_52 {dimension_numbers = #tpu.dot_dimension_numbers<[1], [1], [0], [0], [0, 0, 1, 0], [], []>} : vector<5x32xbf16>, vector<8x32xbf16>, vector<5x8xf32> -> vector<5x8xf32>
    "tpu.trace_stop"() : () -> ()
    %137 = vector.broadcast %109 : vector<1x8xf32> to vector<5x8xf32>
    %138 = arith.addf %136, %137 : vector<5x8xf32>
    %cst_53 = arith.constant dense<0xFF800000> : vector<5xf32>
    %139 = vector.multi_reduction <maximumf>, %138, %cst_53 [1] : vector<5x8xf32> to vector<5xf32>
    %140 = vector.shape_cast %139 : vector<5xf32> to vector<5x1xf32>
    %141 = vector.broadcast %140 : vector<5x1xf32> to vector<5x8xf32>
    %142 = arith.subf %138, %141 : vector<5x8xf32>
    %143 = math.exp %142 : vector<5x8xf32>
    %cst_54 = arith.constant dense<0.000000e+00> : vector<5xf32>
    %144 = vector.multi_reduction <add>, %143, %cst_54 [1] : vector<5x8xf32> to vector<5xf32>
    %145 = vector.shape_cast %144 : vector<5xf32> to vector<5x1xf32>
    %146 = tpu.reciprocal %145 {approx = true} : vector<5x1xf32> -> vector<5x1xf32>
    %147 = vector.broadcast %146 : vector<5x1xf32> to vector<5x8xf32>
    %148 = arith.mulf %143, %147 : vector<5x8xf32>
    %149 = arith.truncf %148 : vector<5x8xf32> to vector<5x8xbf16>
    %cst_55 = arith.constant dense<0.000000e+00> : vector<5x32xf32>
    %150 = tpu.matmul %149, %110, %cst_55 {dimension_numbers = #tpu.dot_dimension_numbers<[1], [0], [0], [1], [0, 0, 1, 1], [], []>} : vector<5x8xbf16>, vector<8x32xbf16>, vector<5x32xf32> -> vector<5x32xf32>
    %c0_56 = arith.constant 0 : index
    %c0_57 = arith.constant 0 : index
    %151 = vector.load %arg13[%c0_56, %c0_57] : memref<32x32xbf16, #tpu.memory_space<vmem>>, vector<32x32xbf16>
    %cst_58 = arith.constant dense<0.000000e+00> : vector<5x32xf32>
    %152 = tpu.matmul %120, %151, %cst_58 {dimension_numbers = #tpu.dot_dimension_numbers<[1], [0], [0], [1], [0, 0, 1, 1], [], []>} : vector<5x32xbf16>, vector<32x32xbf16>, vector<5x32xf32> -> vector<5x32xf32>
    %153 = arith.truncf %135 : vector<5x32xf32> to vector<5x32xbf16>
    %c0_59 = arith.constant 0 : index
    %c0_60 = arith.constant 0 : index
    %154 = vector.load %arg14[%c0_59, %c0_60] : memref<32x32xbf16, #tpu.memory_space<vmem>>, vector<32x32xbf16>
    %cst_61 = arith.constant dense<0.000000e+00> : vector<5x32xf32>
    %155 = tpu.matmul %153, %154, %cst_61 {dimension_numbers = #tpu.dot_dimension_numbers<[1], [0], [0], [1], [0, 0, 1, 1], [], []>} : vector<5x32xbf16>, vector<32x32xbf16>, vector<5x32xf32> -> vector<5x32xf32>
    %156 = arith.addf %152, %155 : vector<5x32xf32>
    %157 = arith.truncf %150 : vector<5x32xf32> to vector<5x32xbf16>
    %c0_62 = arith.constant 0 : index
    %c0_63 = arith.constant 0 : index
    %158 = vector.load %arg15[%c0_62, %c0_63] : memref<32x32xbf16, #tpu.memory_space<vmem>>, vector<32x32xbf16>
    %cst_64 = arith.constant dense<0.000000e+00> : vector<5x32xf32>
    %159 = tpu.matmul %157, %158, %cst_64 {dimension_numbers = #tpu.dot_dimension_numbers<[1], [0], [0], [1], [0, 0, 1, 1], [], []>} : vector<5x32xbf16>, vector<32x32xbf16>, vector<5x32xf32> -> vector<5x32xf32>
    %160 = arith.addf %156, %159 : vector<5x32xf32>
    %161 = vector.broadcast %10 : vector<1x32xf32> to vector<5x32xf32>
    %162 = arith.addf %160, %161 : vector<5x32xf32>
    %163 = math.tanh %162 : vector<5x32xf32>
    %c0_65 = arith.constant 0 : index
    %c0_66 = arith.constant 0 : index
    %c0_67 = arith.constant 0 : index
    %164 = vector.load %arg19[%c0_65, %c0_66, %c0_67] : memref<1x5x32xf32, #tpu.memory_space<vmem>>, vector<1x5x32xf32>
    %165 = vector.shape_cast %164 : vector<1x5x32xf32> to vector<5x32xf32>
    %166 = vector.shape_cast %163 : vector<5x32xf32> to vector<1x5x32xf32>
    tpu.vector_store %arg19[%c0_65, %c0_66, %c0_67], %166 {strides = array<i32>} : memref<1x5x32xf32, #tpu.memory_space<vmem>>, vector<1x5x32xf32>,
    %c0_68 = arith.constant 0 : index
    %c0_69 = arith.constant 0 : index
    %c0_70 = arith.constant 0 : index
    %167 = vector.load %arg20[%c0_68, %c0_69, %c0_70] : memref<1x5x8xf32, #tpu.memory_space<vmem>>, vector<1x5x8xf32>
    %168 = vector.shape_cast %167 : vector<1x5x8xf32> to vector<5x8xf32>
    %169 = vector.shape_cast %133 : vector<5x8xf32> to vector<1x5x8xf32>
    tpu.vector_store %arg20[%c0_68, %c0_69, %c0_70], %169 {strides = array<i32>} : memref<1x5x8xf32, #tpu.memory_space<vmem>>, vector<1x5x8xf32>,
    %c0_71 = arith.constant 0 : index
    %c0_72 = arith.constant 0 : index
    %c0_73 = arith.constant 0 : index
    %170 = vector.load %arg21[%c0_71, %c0_72, %c0_73] : memref<1x5x8xf32, #tpu.memory_space<vmem>>, vector<1x5x8xf32>
    %171 = vector.shape_cast %170 : vector<1x5x8xf32> to vector<5x8xf32>
    %172 = vector.shape_cast %148 : vector<5x8xf32> to vector<1x5x8xf32>
    tpu.vector_store %arg21[%c0_71, %c0_72, %c0_73], %172 {strides = array<i32>} : memref<1x5x8xf32, #tpu.memory_space<vmem>>, vector<1x5x8xf32>,
    return
  }
  func.func @transform_0(%arg0: i32, %arg1: memref<2xi32, #tpu.memory_space<smem>>, %arg2: memref<2xi32, #tpu.memory_space<smem>>) -> (i32, i32, i32) {
    %c0_i32 = arith.constant 0 : i32
    %c0_i32_0 = arith.constant 0 : i32
    %c0_i32_1 = arith.constant 0 : i32
    return %arg0, %c0_i32, %c0_i32_0 : i32, i32, i32
  }
  func.func @transform_1(%arg0: i32, %arg1: memref<2xi32, #tpu.memory_space<smem>>, %arg2: memref<2xi32, #tpu.memory_space<smem>>) -> (i32, i32, i32) {
    %c0_i32 = arith.constant 0 : i32
    %c0_i32_0 = arith.constant 0 : i32
    %c0_i32_1 = arith.constant 0 : i32
    return %arg0, %c0_i32, %c0_i32_0 : i32, i32, i32
  }
  func.func @transform_2(%arg0: i32, %arg1: memref<2xi32, #tpu.memory_space<smem>>, %arg2: memref<2xi32, #tpu.memory_space<smem>>) -> (i32, i32, i32) {
    %c0_i32 = arith.constant 0 : i32
    %c0_i32_0 = arith.constant 0 : i32
    %c0_i32_1 = arith.constant 0 : i32
    return %arg0, %c0_i32, %c0_i32_0 : i32, i32, i32
  }
  func.func @transform_3(%arg0: i32, %arg1: memref<2xi32, #tpu.memory_space<smem>>, %arg2: memref<2xi32, #tpu.memory_space<smem>>) -> (i32, i32, i32) {
    %c0_i32 = arith.constant 0 : i32
    %c0_i32_0 = arith.constant 0 : i32
    %c0_i32_1 = arith.constant 0 : i32
    return %arg0, %c0_i32, %c0_i32_0 : i32, i32, i32
  }
  func.func @transform_4(%arg0: i32, %arg1: memref<2xi32, #tpu.memory_space<smem>>, %arg2: memref<2xi32, #tpu.memory_space<smem>>) -> (i32, i32) {
    %c0_i32 = arith.constant 0 : i32
    %c0_i32_0 = arith.constant 0 : i32
    %c0_i32_1 = arith.constant 0 : i32
    return %c0_i32, %c0_i32_0 : i32, i32
  }
  func.func @transform_5(%arg0: i32, %arg1: memref<2xi32, #tpu.memory_space<smem>>, %arg2: memref<2xi32, #tpu.memory_space<smem>>) -> (i32, i32) {
    %c0_i32 = arith.constant 0 : i32
    %c0_i32_0 = arith.constant 0 : i32
    %c0_i32_1 = arith.constant 0 : i32
    return %c0_i32, %c0_i32_0 : i32, i32
  }
  func.func @transform_6(%arg0: i32, %arg1: memref<2xi32, #tpu.memory_space<smem>>, %arg2: memref<2xi32, #tpu.memory_space<smem>>) -> (i32, i32) {
    %c0_i32 = arith.constant 0 : i32
    %c0_i32_0 = arith.constant 0 : i32
    %c0_i32_1 = arith.constant 0 : i32
    return %c0_i32, %c0_i32_0 : i32, i32
  }
  func.func @transform_7(%arg0: i32, %arg1: memref<2xi32, #tpu.memory_space<smem>>, %arg2: memref<2xi32, #tpu.memory_space<smem>>) -> (i32, i32) {
    %c0_i32 = arith.constant 0 : i32
    %c0_i32_0 = arith.constant 0 : i32
    %c0_i32_1 = arith.constant 0 : i32
    return %c0_i32, %c0_i32_0 : i32, i32
  }
  func.func @transform_8(%arg0: i32, %arg1: memref<2xi32, #tpu.memory_space<smem>>, %arg2: memref<2xi32, #tpu.memory_space<smem>>) -> (i32, i32) {
    %c0_i32 = arith.constant 0 : i32
    %c0_i32_0 = arith.constant 0 : i32
    %c0_i32_1 = arith.constant 0 : i32
    return %c0_i32, %c0_i32_0 : i32, i32
  }
  func.func @transform_9(%arg0: i32, %arg1: memref<2xi32, #tpu.memory_space<smem>>, %arg2: memref<2xi32, #tpu.memory_space<smem>>) -> (i32, i32) {
    %c0_i32 = arith.constant 0 : i32
    %c0_i32_0 = arith.constant 0 : i32
    %c0_i32_1 = arith.constant 0 : i32
    return %c0_i32, %c0_i32_0 : i32, i32
  }
  func.func @transform_10(%arg0: i32, %arg1: memref<2xi32, #tpu.memory_space<smem>>, %arg2: memref<2xi32, #tpu.memory_space<smem>>) -> (i32, i32) {
    %c0_i32 = arith.constant 0 : i32
    %c0_i32_0 = arith.constant 0 : i32
    %c0_i32_1 = arith.constant 0 : i32
    return %c0_i32, %c0_i32_0 : i32, i32
  }
  func.func @transform_11(%arg0: i32, %arg1: memref<2xi32, #tpu.memory_space<smem>>, %arg2: memref<2xi32, #tpu.memory_space<smem>>) -> (i32, i32) {
    %c0_i32 = arith.constant 0 : i32
    %c0_i32_0 = arith.constant 0 : i32
    %c0_i32_1 = arith.constant 0 : i32
    return %c0_i32, %c0_i32_0 : i32, i32
  }
  func.func @transform_12(%arg0: i32, %arg1: memref<2xi32, #tpu.memory_space<smem>>, %arg2: memref<2xi32, #tpu.memory_space<smem>>) -> (i32, i32) {
    %c0_i32 = arith.constant 0 : i32
    %c0_i32_0 = arith.constant 0 : i32
    %c0_i32_1 = arith.constant 0 : i32
    return %c0_i32, %c0_i32_0 : i32, i32
  }
  func.func @transform_13(%arg0: i32, %arg1: memref<2xi32, #tpu.memory_space<smem>>, %arg2: memref<2xi32, #tpu.memory_space<smem>>) -> (i32, i32) {
    %c0_i32 = arith.constant 0 : i32
    %c0_i32_0 = arith.constant 0 : i32
    %c0_i32_1 = arith.constant 0 : i32
    return %c0_i32, %c0_i32_0 : i32, i32
  }
  func.func @transform_14(%arg0: i32, %arg1: memref<2xi32, #tpu.memory_space<smem>>, %arg2: memref<2xi32, #tpu.memory_space<smem>>) -> (i32, i32, i32) {
    %c0_i32 = arith.constant 0 : i32
    %c0_i32_0 = arith.constant 0 : i32
    %c0_i32_1 = arith.constant 0 : i32
    return %arg0, %c0_i32, %c0_i32_0 : i32, i32, i32
  }
  func.func @transform_15(%arg0: i32, %arg1: memref<2xi32, #tpu.memory_space<smem>>, %arg2: memref<2xi32, #tpu.memory_space<smem>>) -> (i32, i32, i32) {
    %c0_i32 = arith.constant 0 : i32
    %c0_i32_0 = arith.constant 0 : i32
    %c0_i32_1 = arith.constant 0 : i32
    return %arg0, %c0_i32, %c0_i32_0 : i32, i32, i32
  }
  func.func @transform_16(%arg0: i32, %arg1: memref<2xi32, #tpu.memory_space<smem>>, %arg2: memref<2xi32, #tpu.memory_space<smem>>) -> (i32, i32, i32) {
    %c0_i32 = arith.constant 0 : i32
    %c0_i32_0 = arith.constant 0 : i32
    %c0_i32_1 = arith.constant 0 : i32
    return %arg0, %c0_i32, %c0_i32_0 : i32, i32, i32
  }
  func.func @transform_17(%arg0: i32, %arg1: memref<2xi32, #tpu.memory_space<smem>>, %arg2: memref<2xi32, #tpu.memory_space<smem>>) -> (i32, i32, i32) {
    %c0_i32 = arith.constant 0 : i32
    %c0_i32_0 = arith.constant 0 : i32
    %c0_i32_1 = arith.constant 0 : i32
    return %arg0, %c0_i32, %c0_i32_0 : i32, i32, i32
  }
  func.func @transform_18(%arg0: i32, %arg1: memref<2xi32, #tpu.memory_space<smem>>, %arg2: memref<2xi32, #tpu.memory_space<smem>>) -> (i32, i32, i32) {
    %c0_i32 = arith.constant 0 : i32
    %c0_i32_0 = arith.constant 0 : i32
    %c0_i32_1 = arith.constant 0 : i32
    return %arg0, %c0_i32, %c0_i32_0 : i32, i32, i32
  }
}

</mosaic_0001>

<llo_original>
// kernel: joint_model_forward.1
$region0: #{joint_model_forward.1}
  #allocation0 [shape = 'u32[]', space=smem, size = 0x4, offset = 0x4, fixed_abs, tag = 'smem constant byte address 0x4 - core index']
  #allocation1 [shape = 'u32[144,128]{1,0:T(1,128)}', space=vmem, size = 0x12000, scoped, tag = 'internal scratch']
  #allocation2 [shape = 's32[1]{0}', space=sflag, size = 0x4, scoped, tag = 'scoped memory for joint_model_forward.1']
  #allocation3 [shape = 'u8[512]{0}', space=smem, size = 0x200, scoped, tag = 'prefetched SMEM operand 0']
  #allocation4 [shape = 'u8[512]{0}', space=smem, size = 0x200, scoped, tag = 'prefetched SMEM operand 1']
  %s0 = inlined_call_operand.vmem [shape: s32[2], index: 0, kind: input, shape index: {}]
  %s1 = inlined_call_operand.vmem [shape: s32[2], index: 1, kind: input, shape index: {}]
  %s2 = inlined_call_operand.vmem [shape: bf16[2,8,32], index: 2, kind: input, shape index: {}]
  %s3 = inlined_call_operand.vmem [shape: bf16[2,5,32], index: 3, kind: input, shape index: {}]
  %s4 = inlined_call_operand.vmem [shape: bf16[2,8,32], index: 4, kind: input, shape index: {}]
  %s5 = inlined_call_operand.vmem [shape: bf16[2,5,32], index: 5, kind: input, shape index: {}]
  %s6 = inlined_call_operand.vmem [shape: bf16[32,32], index: 6, kind: input, shape index: {}]
  %s7 = inlined_call_operand.vmem [shape: bf16[32,32], index: 7, kind: input, shape index: {}]
  %s8 = inlined_call_operand.vmem [shape: bf16[32,32], index: 8, kind: input, shape index: {}]
  %s9 = inlined_call_operand.vmem [shape: bf16[32,32], index: 9, kind: input, shape index: {}]
  %s10 = inlined_call_operand.vmem [shape: bf16[32,32], index: 10, kind: input, shape index: {}]
  %s11 = inlined_call_operand.vmem [shape: bf16[32,32], index: 11, kind: input, shape index: {}]
  %s12 = inlined_call_operand.vmem [shape: bf16[32,32], index: 12, kind: input, shape index: {}]
  %s13 = inlined_call_operand.vmem [shape: bf16[32,32], index: 13, kind: input, shape index: {}]
  %s14 = inlined_call_operand.vmem [shape: bf16[32,32], index: 14, kind: input, shape index: {}]
  %s15 = inlined_call_operand.vmem [shape: f32[8,32], index: 15, kind: input, shape index: {}]
  %s16 = inlined_call_operand.vmem [shape: f32[2,5,32], index: 16, kind: output, shape index: {0}]
  %s17 = inlined_call_operand.vmem [shape: f32[2,5,8], index: 17, kind: output, shape index: {1}]
  %s18 = inlined_call_operand.vmem [shape: f32[2,5,32], index: 18, kind: output, shape index: {2}]
  %s19 = inlined_call_operand.vmem [shape: f32[2,5,8], index: 19, kind: output, shape index: {3}]
  %s20 = inlined_call_operand.vmem [shape: f32[2,5,8], index: 20, kind: output, shape index: {4}]
  %21 = xla_tuple %s16, %s17, %s18, %s19, %s20
  %s22 = sld [smem:[#allocation0]]
  $region121: #{joint_model_forward.1} parent=0
    _
  %s24 = ssub.s32 1, %s22
  %s25 = scalar_select 0, %s24, %s22
  %s26 = sshll.u32 %s0, 4
  %s27 = int_to_ptr.vmem [resolvable:$true] %s26
  %29 = dma.vmem_to_smem %s27, 16, [#allocation3], [#allocation2]
  %s30 = sshll.u32 %s1, 4
  %s31 = int_to_ptr.vmem [resolvable:$true] %s30
  %33 = dma.vmem_to_smem %s31, 16, [#allocation4], [#allocation2]
  %34 = dma.done [#allocation2], 32
  %35 = sfence
  loop: start=0, step=1, limit=4
  $region2: #{joint_model_forward.1} parent=0 // loop_pre_header
    _
  $region3: #{joint_model_forward.1} parent=0 // loop_header
    %s37 = sphi 0, %s41
    %p38 = scmp.ge.s32.totalorder %s37, 4
    %s47 = sphi 0, %s49
    %s50 = sphi 0, %s47
    %s51 = sphi 0, %s50
    %s67 = sphi 0, %s51
    %s73 = sphi 0, %s75
    %s76 = sphi 0, %s73
    %s77 = sphi 0, %s76
    %s93 = sphi 0, %s77
    %s99 = sphi 0, %s101
    %s102 = sphi 0, %s99
    %s103 = sphi 0, %s102
    %s119 = sphi 0, %s103
    %s125 = sphi 0, %s127
    %s128 = sphi 0, %s125
    %s129 = sphi 0, %s128
    %s145 = sphi 0, %s129
    %s149 = sphi 0, %s149
    %s151 = sphi 0, %s149
    %s152 = sphi 0, %s151
    %s166 = sphi 0, %s152
    %s170 = sphi 0, %s170
    %s172 = sphi 0, %s170
    %s173 = sphi 0, %s172
    %s187 = sphi 0, %s173
    %s191 = sphi 0, %s191
    %s193 = sphi 0, %s191
    %s194 = sphi 0, %s193
    %s208 = sphi 0, %s194
    %s212 = sphi 0, %s212
    %s214 = sphi 0, %s212
    %s215 = sphi 0, %s214
    %s229 = sphi 0, %s215
    %s233 = sphi 0, %s233
    %s235 = sphi 0, %s233
    %s236 = sphi 0, %s235
    %s250 = sphi 0, %s236
    %s254 = sphi 0, %s254
    %s256 = sphi 0, %s254
    %s257 = sphi 0, %s256
    %s271 = sphi 0, %s257
    %s275 = sphi 0, %s275
    %s277 = sphi 0, %s275
    %s278 = sphi 0, %s277
    %s292 = sphi 0, %s278
    %s296 = sphi 0, %s296
    %s298 = sphi 0, %s296
    %s299 = sphi 0, %s298
    %s313 = sphi 0, %s299
    %s317 = sphi 0, %s317
    %s319 = sphi 0, %s317
    %s320 = sphi 0, %s319
    %s334 = sphi 0, %s320
    %s338 = sphi 0, %s338
    %s340 = sphi 0, %s338
    %s341 = sphi 0, %s340
    %s355 = sphi 0, %s341
    %s361 = sphi 0, %s363
    %s364 = sphi 0, %s361
    %s365 = sphi 0, %s364
    %s381 = sphi 0, %s365
    %s387 = sphi 0, %s389
    %s390 = sphi 0, %s387
    %s391 = sphi 0, %s390
    %s407 = sphi 0, %s391
    %s413 = sphi 0, %s415
    %s416 = sphi 0, %s413
    %s417 = sphi 0, %s416
    %s433 = sphi 0, %s417
    %s439 = sphi 0, %s441
    %s442 = sphi 0, %s439
    %s443 = sphi 0, %s442
    %s459 = sphi 0, %s443
    %s465 = sphi 0, %s467
    %s468 = sphi 0, %s465
    %s469 = sphi 0, %s468
    %s485 = sphi 0, %s469
  $region4: #{joint_model_forward.1} parent=0 // loop_header_branch
    %40 = sbr.rel (%p38) target = $region8
  $region5: #{joint_model_forward.1} parent=0 // loop_body
    %s42 = ssub.s32 %s37, 1
    %s43 = ssub.s32 %s37, 2
    %s44 = sadd.s32 %s37, 1
    %s45 = ssub.s32 %s37, %s44
    %p46 = scmp.eq.s32.totalorder %s45, 0
    %s48 = sadd.s32 %s47, 1
    %s49 = scalar_select %p46, %s47, %s48
    %p52 = pneg %p46
    %p53 = scmp.eq.s32.totalorder %s37, 1
    %p54 = por %p52, %p53
    %p55 = scmp.ne.s32.totalorder %s47, %s50
    %p56 = scmp.eq.s32.totalorder %s37, 0
    %p57 = por %p55, %p56
    %p58 = scmp.ne.s32.totalorder %s47, %s50
    %p59 = scmp.eq.s32.totalorder %s42, 1
    %p60 = por %p58, %p59
    %p61 = scmp.ne.s32.totalorder %s50, %s51
    %p62 = scmp.eq.s32.totalorder %s42, 0
    %p63 = por %p61, %p62
    %p64 = scmp.ne.s32.totalorder %s50, %s51
    %p65 = scmp.eq.s32.totalorder %s43, 1
    %p66 = por %p64, %p65
    %p68 = scmp.ne.s32.totalorder %s51, %s67
    %p69 = scmp.eq.s32.totalorder %s43, 0
    %p70 = por %p68, %p69
    %s71 = ssub.s32 %s37, %s44
    %p72 = scmp.eq.s32.totalorder %s71, 0
    %s74 = sadd.s32 %s73, 1
    %s75 = scalar_select %p72, %s73, %s74
    %p78 = pneg %p72
    %p79 = scmp.eq.s32.totalorder %s37, 1
    %p80 = por %p78, %p79
    %p81 = scmp.ne.s32.totalorder %s73, %s76
    %p82 = scmp.eq.s32.totalorder %s37, 0
    %p83 = por %p81, %p82
    %p84 = scmp.ne.s32.totalorder %s73, %s76
    %p85 = scmp.eq.s32.totalorder %s42, 1
    %p86 = por %p84, %p85
    %p87 = scmp.ne.s32.totalorder %s76, %s77
    %p88 = scmp.eq.s32.totalorder %s42, 0
    %p89 = por %p87, %p88
    %p90 = scmp.ne.s32.totalorder %s76, %s77
    %p91 = scmp.eq.s32.totalorder %s43, 1
    %p92 = por %p90, %p91
    %p94 = scmp.ne.s32.totalorder %s77, %s93
    %p95 = scmp.eq.s32.totalorder %s43, 0
    %p96 = por %p94, %p95
    %s97 = ssub.s32 %s37, %s44
    %p98 = scmp.eq.s32.totalorder %s97, 0
    %s100 = sadd.s32 %s99, 1
    %s101 = scalar_select %p98, %s99, %s100
    %p104 = pneg %p98
    %p105 = scmp.eq.s32.totalorder %s37, 1
    %p106 = por %p104, %p105
    %p107 = scmp.ne.s32.totalorder %s99, %s102
    %p108 = scmp.eq.s32.totalorder %s37, 0
    %p109 = por %p107, %p108
    %p110 = scmp.ne.s32.totalorder %s99, %s102
    %p111 = scmp.eq.s32.totalorder %s42, 1
    %p112 = por %p110, %p111
    %p113 = scmp.ne.s32.totalorder %s102, %s103
    %p114 = scmp.eq.s32.totalorder %s42, 0
    %p115 = por %p113, %p114
    %p116 = scmp.ne.s32.totalorder %s102, %s103
    %p117 = scmp.eq.s32.totalorder %s43, 1
    %p118 = por %p116, %p117
    %p120 = scmp.ne.s32.totalorder %s103, %s119
    %p121 = scmp.eq.s32.totalorder %s43, 0
    %p122 = por %p120, %p121
    %s123 = ssub.s32 %s37, %s44
    %p124 = scmp.eq.s32.totalorder %s123, 0
    %s126 = sadd.s32 %s125, 1
    %s127 = scalar_select %p124, %s125, %s126
    %p130 = pneg %p124
    %p131 = scmp.eq.s32.totalorder %s37, 1
    %p132 = por %p130, %p131
    %p133 = scmp.ne.s32.totalorder %s125, %s128
    %p134 = scmp.eq.s32.totalorder %s37, 0
    %p135 = por %p133, %p134
    %p136 = scmp.ne.s32.totalorder %s125, %s128
    %p137 = scmp.eq.s32.totalorder %s42, 1
    %p138 = por %p136, %p137
    %p139 = scmp.ne.s32.totalorder %s128, %s129
    %p140 = scmp.eq.s32.totalorder %s42, 0
    %p141 = por %p139, %p140
    %p142 = scmp.ne.s32.totalorder %s128, %s129
    %p143 = scmp.eq.s32.totalorder %s43, 1
    %p144 = por %p142, %p143
    %p146 = scmp.ne.s32.totalorder %s129, %s145
    %p147 = scmp.eq.s32.totalorder %s43, 0
    %p148 = por %p146, %p147
    %s150 = sadd.s32 %s149, 1
    %p153 = scmp.eq.s32.totalorder %s37, 1
    %p154 = scmp.ne.s32.totalorder %s149, %s151
    %p155 = scmp.eq.s32.totalorder %s37, 0
    %p156 = por %p154, %p155
    %p157 = scmp.ne.s32.totalorder %s149, %s151
    %p158 = scmp.eq.s32.totalorder %s42, 1
    %p159 = por %p157, %p158
    %p160 = scmp.ne.s32.totalorder %s151, %s152
    %p161 = scmp.eq.s32.totalorder %s42, 0
    %p162 = por %p160, %p161
    %p163 = scmp.ne.s32.totalorder %s151, %s152
    %p164 = scmp.eq.s32.totalorder %s43, 1
    %p165 = por %p163, %p164
    %p167 = scmp.ne.s32.totalorder %s152, %s166
    %p168 = scmp.eq.s32.totalorder %s43, 0
    %p169 = por %p167, %p168
    %s171 = sadd.s32 %s170, 1
    %p174 = scmp.eq.s32.totalorder %s37, 1
    %p175 = scmp.ne.s32.totalorder %s170, %s172
    %p176 = scmp.eq.s32.totalorder %s37, 0
    %p177 = por %p175, %p176
    %p178 = scmp.ne.s32.totalorder %s170, %s172
    %p179 = scmp.eq.s32.totalorder %s42, 1
    %p180 = por %p178, %p179
    %p181 = scmp.ne.s32.totalorder %s172, %s173
    %p182 = scmp.eq.s32.totalorder %s42, 0
    %p183 = por %p181, %p182
    %p184 = scmp.ne.s32.totalorder %s172, %s173
    %p185 = scmp.eq.s32.totalorder %s43, 1
    %p186 = por %p184, %p185
    %p188 = scmp.ne.s32.totalorder %s173, %s187
    %p189 = scmp.eq.s32.totalorder %s43, 0
    %p190 = por %p188, %p189
    %s192 = sadd.s32 %s191, 1
    %p195 = scmp.eq.s32.totalorder %s37, 1
    %p196 = scmp.ne.s32.totalorder %s191, %s193
    %p197 = scmp.eq.s32.totalorder %s37, 0
    %p198 = por %p196, %p197
    %p199 = scmp.ne.s32.totalorder %s191, %s193
    %p200 = scmp.eq.s32.totalorder %s42, 1
    %p201 = por %p199, %p200
    %p202 = scmp.ne.s32.totalorder %s193, %s194
    %p203 = scmp.eq.s32.totalorder %s42, 0
    %p204 = por %p202, %p203
    %p205 = scmp.ne.s32.totalorder %s193, %s194
    %p206 = scmp.eq.s32.totalorder %s43, 1
    %p207 = por %p205, %p206
    %p209 = scmp.ne.s32.totalorder %s194, %s208
    %p210 = scmp.eq.s32.totalorder %s43, 0
    %p211 = por %p209, %p210
    %s213 = sadd.s32 %s212, 1
    %p216 = scmp.eq.s32.totalorder %s37, 1
    %p217 = scmp.ne.s32.totalorder %s212, %s214
    %p218 = scmp.eq.s32.totalorder %s37, 0
    %p219 = por %p217, %p218
    %p220 = scmp.ne.s32.totalorder %s212, %s214
    %p221 = scmp.eq.s32.totalorder %s42, 1
    %p222 = por %p220, %p221
    %p223 = scmp.ne.s32.totalorder %s214, %s215
    %p224 = scmp.eq.s32.totalorder %s42, 0
    %p225 = por %p223, %p224
    %p226 = scmp.ne.s32.totalorder %s214, %s215
    %p227 = scmp.eq.s32.totalorder %s43, 1
    %p228 = por %p226, %p227
    %p230 = scmp.ne.s32.totalorder %s215, %s229
    %p231 = scmp.eq.s32.totalorder %s43, 0
    %p232 = por %p230, %p231
    %s234 = sadd.s32 %s233, 1
    %p237 = scmp.eq.s32.totalorder %s37, 1
    %p238 = scmp.ne.s32.totalorder %s233, %s235
    %p239 = scmp.eq.s32.totalorder %s37, 0
    %p240 = por %p238, %p239
    %p241 = scmp.ne.s32.totalorder %s233, %s235
    %p242 = scmp.eq.s32.totalorder %s42, 1
    %p243 = por %p241, %p242
    %p244 = scmp.ne.s32.totalorder %s235, %s236
    %p245 = scmp.eq.s32.totalorder %s42, 0
    %p246 = por %p244, %p245
    %p247 = scmp.ne.s32.totalorder %s235, %s236
    %p248 = scmp.eq.s32.totalorder %s43, 1
    %p249 = por %p247, %p248
    %p251 = scmp.ne.s32.totalorder %s236, %s250
    %p252 = scmp.eq.s32.totalorder %s43, 0
    %p253 = por %p251, %p252
    %s255 = sadd.s32 %s254, 1
    %p258 = scmp.eq.s32.totalorder %s37, 1
    %p259 = scmp.ne.s32.totalorder %s254, %s256
    %p260 = scmp.eq.s32.totalorder %s37, 0
    %p261 = por %p259, %p260
    %p262 = scmp.ne.s32.totalorder %s254, %s256
    %p263 = scmp.eq.s32.totalorder %s42, 1
    %p264 = por %p262, %p263
    %p265 = scmp.ne.s32.totalorder %s256, %s257
    %p266 = scmp.eq.s32.totalorder %s42, 0
    %p267 = por %p265, %p266
    %p268 = scmp.ne.s32.totalorder %s256, %s257
    %p269 = scmp.eq.s32.totalorder %s43, 1
    %p270 = por %p268, %p269
    %p272 = scmp.ne.s32.totalorder %s257, %s271
    %p273 = scmp.eq.s32.totalorder %s43, 0
    %p274 = por %p272, %p273
    %s276 = sadd.s32 %s275, 1
    %p279 = scmp.eq.s32.totalorder %s37, 1
    %p280 = scmp.ne.s32.totalorder %s275, %s277
    %p281 = scmp.eq.s32.totalorder %s37, 0
    %p282 = por %p280, %p281
    %p283 = scmp.ne.s32.totalorder %s275, %s277
    %p284 = scmp.eq.s32.totalorder %s42, 1
    %p285 = por %p283, %p284
    %p286 = scmp.ne.s32.totalorder %s277, %s278
    %p287 = scmp.eq.s32.totalorder %s42, 0
    %p288 = por %p286, %p287
    %p289 = scmp.ne.s32.totalorder %s277, %s278
    %p290 = scmp.eq.s32.totalorder %s43, 1
    %p291 = por %p289, %p290
    %p293 = scmp.ne.s32.totalorder %s278, %s292
    %p294 = scmp.eq.s32.totalorder %s43, 0
    %p295 = por %p293, %p294
    %s297 = sadd.s32 %s296, 1
    %p300 = scmp.eq.s32.totalorder %s37, 1
    %p301 = scmp.ne.s32.totalorder %s296, %s298
    %p302 = scmp.eq.s32.totalorder %s37, 0
    %p303 = por %p301, %p302
    %p304 = scmp.ne.s32.totalorder %s296, %s298
    %p305 = scmp.eq.s32.totalorder %s42, 1
    %p306 = por %p304, %p305
    %p307 = scmp.ne.s32.totalorder %s298, %s299
    %p308 = scmp.eq.s32.totalorder %s42, 0
    %p309 = por %p307, %p308
    %p310 = scmp.ne.s32.totalorder %s298, %s299
    %p311 = scmp.eq.s32.totalorder %s43, 1
    %p312 = por %p310, %p311
    %p314 = scmp.ne.s32.totalorder %s299, %s313
    %p315 = scmp.eq.s32.totalorder %s43, 0
    %p316 = por %p314, %p315
    %s318 = sadd.s32 %s317, 1
    %p321 = scmp.eq.s32.totalorder %s37, 1
    %p322 = scmp.ne.s32.totalorder %s317, %s319
    %p323 = scmp.eq.s32.totalorder %s37, 0
    %p324 = por %p322, %p323
    %p325 = scmp.ne.s32.totalorder %s317, %s319
    %p326 = scmp.eq.s32.totalorder %s42, 1
    %p327 = por %p325, %p326
    %p328 = scmp.ne.s32.totalorder %s319, %s320
    %p329 = scmp.eq.s32.totalorder %s42, 0
    %p330 = por %p328, %p329
    %p331 = scmp.ne.s32.totalorder %s319, %s320
    %p332 = scmp.eq.s32.totalorder %s43, 1
    %p333 = por %p331, %p332
    %p335 = scmp.ne.s32.totalorder %s320, %s334
    %p336 = scmp.eq.s32.totalorder %s43, 0
    %p337 = por %p335, %p336
    %s339 = sadd.s32 %s338, 1
    %p342 = scmp.eq.s32.totalorder %s37, 1
    %p343 = scmp.ne.s32.totalorder %s338, %s340
    %p344 = scmp.eq.s32.totalorder %s37, 0
    %p345 = por %p343, %p344
    %p346 = scmp.ne.s32.totalorder %s338, %s340
    %p347 = scmp.eq.s32.totalorder %s42, 1
    %p348 = por %p346, %p347
    %p349 = scmp.ne.s32.totalorder %s340, %s341
    %p350 = scmp.eq.s32.totalorder %s42, 0
    %p351 = por %p349, %p350
    %p352 = scmp.ne.s32.totalorder %s340, %s341
    %p353 = scmp.eq.s32.totalorder %s43, 1
    %p354 = por %p352, %p353
    %p356 = scmp.ne.s32.totalorder %s341, %s355
    %p357 = scmp.eq.s32.totalorder %s43, 0
    %p358 = por %p356, %p357
    %s359 = ssub.s32 %s37, %s44
    %p360 = scmp.eq.s32.totalorder %s359, 0
    %s362 = sadd.s32 %s361, 1
    %s363 = scalar_select %p360, %s361, %s362
    %p366 = pneg %p360
    %p367 = scmp.eq.s32.totalorder %s37, 1
    %p368 = por %p366, %p367
    %p369 = scmp.ne.s32.totalorder %s361, %s364
    %p370 = scmp.eq.s32.totalorder %s37, 0
    %p371 = por %p369, %p370
    %p372 = scmp.ne.s32.totalorder %s361, %s364
    %p373 = scmp.eq.s32.totalorder %s42, 1
    %p374 = por %p372, %p373
    %p375 = scmp.ne.s32.totalorder %s364, %s365
    %p376 = scmp.eq.s32.totalorder %s42, 0
    %p377 = por %p375, %p376
    %p378 = scmp.ne.s32.totalorder %s364, %s365
    %p379 = scmp.eq.s32.totalorder %s43, 1
    %p380 = por %p378, %p379
    %p382 = scmp.ne.s32.totalorder %s365, %s381
    %p383 = scmp.eq.s32.totalorder %s43, 0
    %p384 = por %p382, %p383
    %s385 = ssub.s32 %s37, %s44
    %p386 = scmp.eq.s32.totalorder %s385, 0
    %s388 = sadd.s32 %s387, 1
    %s389 = scalar_select %p386, %s387, %s388
    %p392 = pneg %p386
    %p393 = scmp.eq.s32.totalorder %s37, 1
    %p394 = por %p392, %p393
    %p395 = scmp.ne.s32.totalorder %s387, %s390
    %p396 = scmp.eq.s32.totalorder %s37, 0
    %p397 = por %p395, %p396
    %p398 = scmp.ne.s32.totalorder %s387, %s390
    %p399 = scmp.eq.s32.totalorder %s42, 1
    %p400 = por %p398, %p399
    %p401 = scmp.ne.s32.totalorder %s390, %s391
    %p402 = scmp.eq.s32.totalorder %s42, 0
    %p403 = por %p401, %p402
    %p404 = scmp.ne.s32.totalorder %s390, %s391
    %p405 = scmp.eq.s32.totalorder %s43, 1
    %p406 = por %p404, %p405
    %p408 = scmp.ne.s32.totalorder %s391, %s407
    %p409 = scmp.eq.s32.totalorder %s43, 0
    %p410 = por %p408, %p409
    %s411 = ssub.s32 %s37, %s44
    %p412 = scmp.eq.s32.totalorder %s411, 0
    %s414 = sadd.s32 %s413, 1
    %s415 = scalar_select %p412, %s413, %s414
    %p418 = pneg %p412
    %p419 = scmp.eq.s32.totalorder %s37, 1
    %p420 = por %p418, %p419
    %p421 = scmp.ne.s32.totalorder %s413, %s416
    %p422 = scmp.eq.s32.totalorder %s37, 0
    %p423 = por %p421, %p422
    %p424 = scmp.ne.s32.totalorder %s413, %s416
    %p425 = scmp.eq.s32.totalorder %s42, 1
    %p426 = por %p424, %p425
    %p427 = scmp.ne.s32.totalorder %s416, %s417
    %p428 = scmp.eq.s32.totalorder %s42, 0
    %p429 = por %p427, %p428
    %p430 = scmp.ne.s32.totalorder %s416, %s417
    %p431 = scmp.eq.s32.totalorder %s43, 1
    %p432 = por %p430, %p431
    %p434 = scmp.ne.s32.totalorder %s417, %s433
    %p435 = scmp.eq.s32.totalorder %s43, 0
    %p436 = por %p434, %p435
    %s437 = ssub.s32 %s37, %s44
    %p438 = scmp.eq.s32.totalorder %s437, 0
    %s440 = sadd.s32 %s439, 1
    %s441 = scalar_select %p438, %s439, %s440
    %p444 = pneg %p438
    %p445 = scmp.eq.s32.totalorder %s37, 1
    %p446 = por %p444, %p445
    %p447 = scmp.ne.s32.totalorder %s439, %s442
    %p448 = scmp.eq.s32.totalorder %s37, 0
    %p449 = por %p447, %p448
    %p450 = scmp.ne.s32.totalorder %s439, %s442
    %p451 = scmp.eq.s32.totalorder %s42, 1
    %p452 = por %p450, %p451
    %p453 = scmp.ne.s32.totalorder %s442, %s443
    %p454 = scmp.eq.s32.totalorder %s42, 0
    %p455 = por %p453, %p454
    %p456 = scmp.ne.s32.totalorder %s442, %s443
    %p457 = scmp.eq.s32.totalorder %s43, 1
    %p458 = por %p456, %p457
    %p460 = scmp.ne.s32.totalorder %s443, %s459
    %p461 = scmp.eq.s32.totalorder %s43, 0
    %p462 = por %p460, %p461
    %s463 = ssub.s32 %s37, %s44
    %p464 = scmp.eq.s32.totalorder %s463, 0
    %s466 = sadd.s32 %s465, 1
    %s467 = scalar_select %p464, %s465, %s466
    %p470 = pneg %p464
    %p471 = scmp.eq.s32.totalorder %s37, 1
    %p472 = por %p470, %p471
    %p473 = scmp.ne.s32.totalorder %s465, %s468
    %p474 = scmp.eq.s32.totalorder %s37, 0
    %p475 = por %p473, %p474
    %p476 = scmp.ne.s32.totalorder %s465, %s468
    %p477 = scmp.eq.s32.totalorder %s42, 1
    %p478 = por %p476, %p477
    %p479 = scmp.ne.s32.totalorder %s468, %s469
    %p480 = scmp.eq.s32.totalorder %s42, 0
    %p481 = por %p479, %p480
    %p482 = scmp.ne.s32.totalorder %s468, %s469
    %p483 = scmp.eq.s32.totalorder %s43, 1
    %p484 = por %p482, %p483
    %p486 = scmp.ne.s32.totalorder %s469, %s485
    %p487 = scmp.eq.s32.totalorder %s43, 0
    %p488 = por %p486, %p487
    %p489 = scmp.le.s32.totalorder 1, %s37
    %p490 = scmp.lt.s32.totalorder %s37, 3
    %p491 = pnand %p489, %p490
    %p492 = pneg %p491
    // Predicated region
    $region9: #{joint_model_forward.1} parent=5 // pred_check
      _
    $region10: #{joint_model_forward.1} parent=5 // pred_check_branch
      %494 = sbr.rel (%p491) target = $region12
    $region11: #{joint_model_forward.1} parent=5 // pred_region
      %s495 = ssub.s32 %s37, 1
      // Predicated region
      $region13: #{joint_model_forward.1} parent=11 // pred_check
        %p496 = pneg %p162
      $region14: #{joint_model_forward.1} parent=11 // pred_check_branch
        %498 = sbr.rel (%p496) target = $region16
      $region15: #{joint_model_forward.1} parent=11 // pred_region
        _
      $region16: #{joint_model_forward.1} parent=11 // pred_fallthru
        _
      // Predicated region
      $region17: #{joint_model_forward.1} parent=11 // pred_check
        %p499 = pneg %p183
      $region18: #{joint_model_forward.1} parent=11 // pred_check_branch
        %501 = sbr.rel (%p499) target = $region20
      $region19: #{joint_model_forward.1} parent=11 // pred_region
        _
      $region20: #{joint_model_forward.1} parent=11 // pred_fallthru
        _
      // Predicated region
      $region21: #{joint_model_forward.1} parent=11 // pred_check
        %p502 = pneg %p204
      $region22: #{joint_model_forward.1} parent=11 // pred_check_branch
        %504 = sbr.rel (%p502) target = $region24
      $region23: #{joint_model_forward.1} parent=11 // pred_region
        _
      $region24: #{joint_model_forward.1} parent=11 // pred_fallthru
        _
      // Predicated region
      $region25: #{joint_model_forward.1} parent=11 // pred_check
        %p505 = pneg %p225
      $region26: #{joint_model_forward.1} parent=11 // pred_check_branch
        %507 = sbr.rel (%p505) target = $region28
      $region27: #{joint_model_forward.1} parent=11 // pred_region
        _
      $region28: #{joint_model_forward.1} parent=11 // pred_fallthru
        _
      // Predicated region
      $region29: #{joint_model_forward.1} parent=11 // pred_check
        %p508 = pneg %p246
      $region30: #{joint_model_forward.1} parent=11 // pred_check_branch
        %510 = sbr.rel (%p508) target = $region32
      $region31: #{joint_model_forward.1} parent=11 // pred_region
        _
      $region32: #{joint_model_forward.1} parent=11 // pred_fallthru
        _
      // Predicated region
      $region33: #{joint_model_forward.1} parent=11 // pred_check
        %p511 = pneg %p267
      $region34: #{joint_model_forward.1} parent=11 // pred_check_branch
        %513 = sbr.rel (%p511) target = $region36
      $region35: #{joint_model_forward.1} parent=11 // pred_region
        _
      $region36: #{joint_model_forward.1} parent=11 // pred_fallthru
        _
      // Predicated region
      $region37: #{joint_model_forward.1} parent=11 // pred_check
        %p514 = pneg %p288
      $region38: #{joint_model_forward.1} parent=11 // pred_check_branch
        %516 = sbr.rel (%p514) target = $region40
      $region39: #{joint_model_forward.1} parent=11 // pred_region
        _
      $region40: #{joint_model_forward.1} parent=11 // pred_fallthru
        _
      // Predicated region
      $region41: #{joint_model_forward.1} parent=11 // pred_check
        %p517 = pneg %p309
      $region42: #{joint_model_forward.1} parent=11 // pred_check_branch
        %519 = sbr.rel (%p517) target = $region44
      $region43: #{joint_model_forward.1} parent=11 // pred_region
        _
      $region44: #{joint_model_forward.1} parent=11 // pred_fallthru
        _
      // Predicated region
      $region45: #{joint_model_forward.1} parent=11 // pred_check
        %p520 = pneg %p330
      $region46: #{joint_model_forward.1} parent=11 // pred_check_branch
        %522 = sbr.rel (%p520) target = $region48
      $region47: #{joint_model_forward.1} parent=11 // pred_region
        _
      $region48: #{joint_model_forward.1} parent=11 // pred_fallthru
        _
      // Predicated region
      $region49: #{joint_model_forward.1} parent=11 // pred_check
        %p523 = pneg %p351
      $region50: #{joint_model_forward.1} parent=11 // pred_check_branch
        %525 = sbr.rel (%p523) target = $region52
      $region51: #{joint_model_forward.1} parent=11 // pred_region
        _
      $region52: #{joint_model_forward.1} parent=11 // pred_fallthru
        _
    $region12: #{joint_model_forward.1} parent=5 // pred_fallthru
      _
    %p526 = scmp.lt.s32.totalorder %s37, 2
    // Predicated region
    $region53: #{joint_model_forward.1} parent=5 // pred_check
      %p527 = pneg %p526
    $region54: #{joint_model_forward.1} parent=5 // pred_check_branch
      %529 = sbr.rel (%p527) target = $region56
    $region55: #{joint_model_forward.1} parent=5 // pred_region
      // Predicated region
      $region57: #{joint_model_forward.1} parent=55 // pred_check
        %p530 = pneg %p57
      $region58: #{joint_model_forward.1} parent=55 // pred_check_branch
        %532 = sbr.rel (%p530) target = $region60
      $region59: #{joint_model_forward.1} parent=55 // pred_region
        %p533 = scmp.lt.s32.totalorder %s37, 1
        %s534 = scalar_select %p533, %s37, 1
        %s535 = smul.addr %s534, 4
        %s536 = scalar_lea.vmem %s2, %s535
      $region60: #{joint_model_forward.1} parent=55 // pred_fallthru
        _
      // Predicated region
      $region61: #{joint_model_forward.1} parent=55 // pred_check
        %p537 = pneg %p83
      $region62: #{joint_model_forward.1} parent=55 // pred_check_branch
        %539 = sbr.rel (%p537) target = $region64
      $region63: #{joint_model_forward.1} parent=55 // pred_region
        %p540 = scmp.lt.s32.totalorder %s37, 1
        %s541 = scalar_select %p540, %s37, 1
        %s542 = smul.addr %s541, 4
        %s543 = scalar_lea.vmem %s3, %s542
      $region64: #{joint_model_forward.1} parent=55 // pred_fallthru
        _
      // Predicated region
      $region65: #{joint_model_forward.1} parent=55 // pred_check
        %p544 = pneg %p109
      $region66: #{joint_model_forward.1} parent=55 // pred_check_branch
        %546 = sbr.rel (%p544) target = $region68
      $region67: #{joint_model_forward.1} parent=55 // pred_region
        %p547 = scmp.lt.s32.totalorder %s37, 1
        %s548 = scalar_select %p547, %s37, 1
        %s549 = smul.addr %s548, 4
        %s550 = scalar_lea.vmem %s4, %s549
      $region68: #{joint_model_forward.1} parent=55 // pred_fallthru
        _
      // Predicated region
      $region69: #{joint_model_forward.1} parent=55 // pred_check
        %p551 = pneg %p135
      $region70: #{joint_model_forward.1} parent=55 // pred_check_branch
        %553 = sbr.rel (%p551) target = $region72
      $region71: #{joint_model_forward.1} parent=55 // pred_region
        %p554 = scmp.lt.s32.totalorder %s37, 1
        %s555 = scalar_select %p554, %s37, 1
        %s556 = smul.addr %s555, 4
        %s557 = scalar_lea.vmem %s5, %s556
      $region72: #{joint_model_forward.1} parent=55 // pred_fallthru
        _
    $region56: #{joint_model_forward.1} parent=5 // pred_fallthru
      _
    %p558 = scmp.le.s32.totalorder 1, %s37
    %p559 = scmp.lt.s32.totalorder %s37, 3
    %p560 = pnand %p558, %p559
    %p561 = pneg %p560
    // Predicated region
    $region73: #{joint_model_forward.1} parent=5 // pred_check
      _
    $region74: #{joint_model_forward.1} parent=5 // pred_check_branch
      %563 = sbr.rel (%p560) target = $region76
    $region75: #{joint_model_forward.1} parent=5 // pred_region
      %s564 = ssub.s32 %s37, 1
      %p565 = scmp.lt.s32.totalorder %s42, 1
      %s566 = scalar_select %p565, %s42, 1
      %s567 = smul.addr %s566, 4
      %s568 = scalar_lea.vmem %s2, %s567
      %p569 = pneg %p63
      %p570 = pneg %p60
      %p571 = scmp.lt.s32.totalorder %s42, 1
      %s572 = scalar_select %p571, %s42, 1
      %s573 = smul.addr %s572, 4
      %s574 = scalar_lea.vmem %s3, %s573
      %p575 = pneg %p89
      %p576 = pneg %p86
      %p577 = scmp.lt.s32.totalorder %s42, 1
      %s578 = scalar_select %p577, %s42, 1
      %s579 = smul.addr %s578, 4
      %s580 = scalar_lea.vmem %s4, %s579
      %p581 = pneg %p115
      %p582 = pneg %p112
      %p583 = scmp.lt.s32.totalorder %s42, 1
      %s584 = scalar_select %p583, %s42, 1
      %s585 = smul.addr %s584, 4
      %s586 = scalar_lea.vmem %s5, %s585
      %p587 = pneg %p141
      %p588 = pneg %p138
      %p589 = pneg %p162
      %p590 = pneg %p159
      %p591 = pneg %p183
      %p592 = pneg %p180
      %p593 = pneg %p204
      %p594 = pneg %p201
      %p595 = pneg %p225
      %p596 = pneg %p222
      %p597 = pneg %p246
      %p598 = pneg %p243
      %p599 = pneg %p267
      %p600 = pneg %p264
      %p601 = pneg %p288
      %p602 = pneg %p285
      %p603 = pneg %p309
      %p604 = pneg %p306
      %p605 = pneg %p330
      %p606 = pneg %p327
      %p607 = pneg %p351
      %p608 = pneg %p348
      %p609 = pneg %p377
      %p610 = pneg %p374
      %p611 = scmp.lt.s32.totalorder %s42, 1
      %s612 = scalar_select %p611, %s42, 1
      %s613 = smul.addr %s612, 8
      %s614 = scalar_lea.vmem %s16, %s613
      %p615 = pneg %p403
      %p616 = pneg %p400
      %p617 = scmp.lt.s32.totalorder %s42, 1
      %s618 = scalar_select %p617, %s42, 1
      %s619 = smul.addr %s618, 8
      %s620 = scalar_lea.vmem %s17, %s619
      %p621 = pneg %p429
      %p622 = pneg %p426
      %p623 = scmp.lt.s32.totalorder %s42, 1
      %s624 = scalar_select %p623, %s42, 1
      %s625 = smul.addr %s624, 8
      %s626 = scalar_lea.vmem %s18, %s625
      %p627 = pneg %p455
      %p628 = pneg %p452
      %p629 = scmp.lt.s32.totalorder %s42, 1
      %s630 = scalar_select %p629, %s42, 1
      %s631 = smul.addr %s630, 8
      %s632 = scalar_lea.vmem %s19, %s631
      %p633 = pneg %p481
      %p634 = pneg %p478
      %p635 = scmp.lt.s32.totalorder %s42, 1
      %s636 = scalar_select %p635, %s42, 1
      %s637 = smul.addr %s636, 8
      %s638 = scalar_lea.vmem %s20, %s637
      %p639 = scmp.lt.s32.totalorder %s42, 1
      %s640 = scalar_select %p639, %s42, 1
      %s641 = smul.addr %s640, 4
      %s642 = scalar_lea.vmem %s2, %s641
      %p643 = scmp.lt.s32.totalorder %s42, 1
      %s644 = scalar_select %p643, %s42, 1
      %s645 = smul.addr %s644, 4
      %s646 = scalar_lea.vmem %s3, %s645
      %p647 = scmp.lt.s32.totalorder %s42, 1
      %s648 = scalar_select %p647, %s42, 1
      %s649 = smul.addr %s648, 4
      %s650 = scalar_lea.vmem %s4, %s649
      %p651 = scmp.lt.s32.totalorder %s42, 1
      %s652 = scalar_select %p651, %s42, 1
      %s653 = smul.addr %s652, 4
      %s654 = scalar_lea.vmem %s5, %s653
      %p655 = scmp.lt.s32.totalorder %s42, 1
      %s656 = scalar_select %p655, %s42, 1
      %s657 = smul.addr %s656, 8
      %s658 = scalar_lea.vmem %s16, %s657
      %p659 = scmp.lt.s32.totalorder %s42, 1
      %s660 = scalar_select %p659, %s42, 1
      %s661 = smul.addr %s660, 8
      %s662 = scalar_lea.vmem %s17, %s661
      %p663 = scmp.lt.s32.totalorder %s42, 1
      %s664 = scalar_select %p663, %s42, 1
      %s665 = smul.addr %s664, 8
      %s666 = scalar_lea.vmem %s18, %s665
      %p667 = scmp.lt.s32.totalorder %s42, 1
      %s668 = scalar_select %p667, %s42, 1
      %s669 = smul.addr %s668, 8
      %s670 = scalar_lea.vmem %s19, %s669
      %p671 = scmp.lt.s32.totalorder %s42, 1
      %s672 = scalar_select %p671, %s42, 1
      %s673 = smul.addr %s672, 8
      %s674 = scalar_lea.vmem %s20, %s673
      %s676 = sld [smem:[#allocation3 + %s42]]
      %s677 = sld [smem:[#allocation4 + %s42]]
      %v678 = vld [vmem:[%s15] sm:$0xff]
      %v679 = vld [vmem:[%s642] sm:$0xf]
      %v680 = vld [vmem:[%s6] sm:$0xf]
      %v681 = vld [vmem:[%s6 + $0x4] sm:$0xf]
      %v682 = vld [vmem:[%s6 + $0x8] sm:$0xf]
      %v683 = vld [vmem:[%s6 + $0xc] sm:$0xf]
      %v684 = vlaneseq
      %v685 = vshrl.u32 %v684, 7
      %v686 = vsub.s32 0, %v685
      %v687 = vrot.slane %v678, %v686
      %v692 = vunpack.c.l.b16 %v680
      %v693 = vunpack.c.l.b16 %v681
      %v694 = vunpack.c.l.b16 %v682
      %v695 = vunpack.c.l.b16 %v683
      %v696 = vpack.c.b16 %v693, %v692
      %v697 = vpack.c.b16 %v695, %v694
      %vm700 = vcmask 261120
      %v702 = vsel %vm700, %v679, 0
      %704 = vmatprep.subr.bf16.mxu0 0
      %705 = vmatpush1.bf16.msra.mxu0 %v696
      %706 = vmatprep.subr.bf16.mxu0 0
      %707 = vmatpush1.bf16.msra.mxu0 %v697
      %708 = vmatprep.subr.bf16.mxu0 0
      %709 = vmatpush1.bf16.msra.mxu0 0
      %710 = vmatprep.subr.bf16.mxu0 0
      %711 = vmatpush1.bf16.msra.mxu0 0
      %712 = vmatprep.subr.bf16.mxu0 0
      %713 = vmatpush1.bf16.msra.mxu0 0
      %714 = vmatprep.subr.bf16.mxu0 0
      %715 = vmatpush1.bf16.msra.mxu0 0
      %716 = vmatprep.subr.bf16.mxu0 0
      %717 = vmatpush1.bf16.msra.mxu0 0
      %718 = vmatprep.subr.bf16.mxu0 0
      %719 = vmatpush1.bf16.msra.mxu0 0
      %720 = vmatprep.subr.bf16.mxu0 0
      %721 = vmatpush1.bf16.msra.mxu0 0
      %722 = vmatprep.subr.bf16.mxu0 0
      %723 = vmatpush1.bf16.msra.mxu0 0
      %724 = vmatprep.subr.bf16.mxu0 0
      %725 = vmatpush1.bf16.msra.mxu0 0
      %726 = vmatprep.subr.bf16.mxu0 0
      %727 = vmatpush1.bf16.msra.mxu0 0
      %728 = vmatprep.subr.bf16.mxu0 0
      %729 = vmatpush1.bf16.msra.mxu0 0
      %730 = vmatprep.subr.bf16.mxu0 0
      %731 = vmatpush1.bf16.msra.mxu0 0
      %732 = vmatprep.subr.bf16.mxu0 0
      %733 = vmatpush1.bf16.msra.mxu0 0
      %734 = vmatprep.subr.bf16.mxu0 0
      %735 = vmatpush1.bf16.msra.mxu0 0
      %736 = vmatprep.mubr.bf16.mxu0 0
      %737 = vmatmul.mubr.bf16.gmra.mrb[0].mxu0 %v702
      %v738 = vpop.f32.mrb[0].mxu0
      %v739 = vadd.f32 %v687, %v738
      %v740 = vpop.f32.mrb[0].mxu0
      %v741 = vpop.f32.mrb[0].mxu0
      %v742 = vpop.f32.mrb[0].mxu0
      %743 = vdwg.mxu0
      %v744 = vtanh.pop %v739
      %v745 = vlaneseq
      %v746 = vshrl.u32 %v745, 7
      %v747 = vstv %s676
      %vm748 = vcmp.lt.s32.totalorder %v746, %v747
      %v749 = vsel %vm748, 1, 0
      %v750 = vcvt.s32.f32 %v749
      %s751 = scvt.s32.f32 %s676
      %v752 = vstv %s751
      %v753 = vrcp.pop %v752
      %v754 = vmul.f32 %v744, %v750
      %v755 = vsel %vm700, %v754, 0.0
      %v756 = vrot.slane %v755, 4
      %v757 = vadd.f32 %v755, %v756
      %v758 = vrot.slane %v757, 2
      %v759 = vadd.f32 %v757, %v758
      %v760 = vrot.slane %v759, 1
      %v761 = vadd.f32 %v759, %v760
      %v762 = vmul.f32 %v761, %v753
      %v763 = vlaneseq
      %v764 = vand.u32 %v763, 127
      %vm765 = vcmp.lt.s32.totalorder %v764, %v747
      %v766 = vsel %vm765, 0.0, -1e+09
      %v767 = vpack.c.bf16 %v744, %v744
      %v768 = vld [vmem:[%s646] sm:$0x7]
      %v769 = vld [vmem:[%s8] sm:$0xf]
      %v770 = vld [vmem:[%s8 + $0x4] sm:$0xf]
      %v771 = vld [vmem:[%s8 + $0x8] sm:$0xf]
      %v772 = vld [vmem:[%s8 + $0xc] sm:$0xf]
      %v777 = vunpack.c.l.b16 %v769
      %v778 = vunpack.c.l.b16 %v770
      %v779 = vunpack.c.l.b16 %v771
      %v780 = vunpack.c.l.b16 %v772
      %v781 = vpack.c.b16 %v778, %v777
      %v782 = vpack.c.b16 %v780, %v779
      %v786 = vsel %vm700, %v768, 0
      %788 = vmatprep.subr.bf16.mxu0 0
      %789 = vmatpush1.bf16.msra.mxu0 %v781
      %790 = vmatprep.subr.bf16.mxu0 0
      %791 = vmatpush1.bf16.msra.mxu0 %v782
      %792 = vmatprep.subr.bf16.mxu0 0
      %793 = vmatpush1.bf16.msra.mxu0 0
      %794 = vmatprep.subr.bf16.mxu0 0
      %795 = vmatpush1.bf16.msra.mxu0 0
      %796 = vmatprep.subr.bf16.mxu0 0
      %797 = vmatpush1.bf16.msra.mxu0 0
      %798 = vmatprep.subr.bf16.mxu0 0
      %799 = vmatpush1.bf16.msra.mxu0 0
      %800 = vmatprep.subr.bf16.mxu0 0
      %801 = vmatpush1.bf16.msra.mxu0 0
      %802 = vmatprep.subr.bf16.mxu0 0
      %803 = vmatpush1.bf16.msra.mxu0 0
      %804 = vmatprep.subr.bf16.mxu0 0
      %805 = vmatpush1.bf16.msra.mxu0 0
      %806 = vmatprep.subr.bf16.mxu0 0
      %807 = vmatpush1.bf16.msra.mxu0 0
      %808 = vmatprep.subr.bf16.mxu0 0
      %809 = vmatpush1.bf16.msra.mxu0 0
      %810 = vmatprep.subr.bf16.mxu0 0
      %811 = vmatpush1.bf16.msra.mxu0 0
      %812 = vmatprep.subr.bf16.mxu0 0
      %813 = vmatpush1.bf16.msra.mxu0 0
      %814 = vmatprep.subr.bf16.mxu0 0
      %815 = vmatpush1.bf16.msra.mxu0 0
      %816 = vmatprep.subr.bf16.mxu0 0
      %817 = vmatpush1.bf16.msra.mxu0 0
      %818 = vmatprep.subr.bf16.mxu0 0
      %819 = vmatpush1.bf16.msra.mxu0 0
      %820 = vmatprep.mubr.bf16.mxu0 0
      %821 = vmatmul.mubr.bf16.gmra.mrb[0].mxu0 %v786
      %v822 = vpop.f32.mrb[0].mxu0
      %v823 = vadd.f32 %v762, %v822
      %v824 = vpop.f32.mrb[0].mxu0
      %v825 = vpop.f32.mrb[0].mxu0
      %v826 = vpop.f32.mrb[0].mxu0
      %827 = vdwg.mxu0
      %v828 = vlaneseq
      %v829 = vshrl.u32 %v828, 7
      %v830 = vsub.s32 2, %v829
      %v831 = vrot.slane %v678, %v830
      %v832 = vadd.f32 %v823, %v831
      %v833 = vtanh.pop %v832
      %v834 = vpack.c.bf16 %v833, %v833
      %v836 = vsel %vm700, %v834, 0
      %v839 = vsel %vm700, %v767, 0
      %841 = vmatprep.subr.bf16.mxu0 0
      %842 = vmatpush1.bf16.xpose.msra.mxu0 %v839
      %843 = vmatprep.subr.bf16.mxu0 0
      %844 = vmatpush1.bf16.xpose.msra.mxu0 0
      %845 = vmatprep.subr.bf16.mxu0 0
      %846 = vmatpush1.bf16.xpose.msra.mxu0 0
      %847 = vmatprep.subr.bf16.mxu0 0
      %848 = vmatpush1.bf16.xpose.msra.mxu0 0
      %849 = vmatprep.subr.bf16.mxu0 0
      %850 = vmatpush1.bf16.xpose.msra.mxu0 0
      %851 = vmatprep.subr.bf16.mxu0 0
      %852 = vmatpush1.bf16.xpose.msra.mxu0 0
      %853 = vmatprep.subr.bf16.mxu0 0
      %854 = vmatpush1.bf16.xpose.msra.mxu0 0
      %855 = vmatprep.subr.bf16.mxu0 0
      %856 = vmatpush1.bf16.xpose.msra.mxu0 0
      %857 = vmatprep.subr.bf16.mxu0 0
      %858 = vmatpush1.bf16.xpose.msra.mxu0 0
      %859 = vmatprep.subr.bf16.mxu0 0
      %860 = vmatpush1.bf16.xpose.msra.mxu0 0
      %861 = vmatprep.subr.bf16.mxu0 0
      %862 = vmatpush1.bf16.xpose.msra.mxu0 0
      %863 = vmatprep.subr.bf16.mxu0 0
      %864 = vmatpush1.bf16.xpose.msra.mxu0 0
      %865 = vmatprep.subr.bf16.mxu0 0
      %866 = vmatpush1.bf16.xpose.msra.mxu0 0
      %867 = vmatprep.subr.bf16.mxu0 0
      %868 = vmatpush1.bf16.xpose.msra.mxu0 0
      %869 = vmatprep.subr.bf16.mxu0 0
      %870 = vmatpush1.bf16.xpose.msra.mxu0 0
      %871 = vmatprep.subr.bf16.mxu0 0
      %872 = vmatpush1.bf16.xpose.msra.mxu0 0
      %873 = vmatprep.mubr.bf16.mxu0 0
      %874 = vmatmul.mubr.bf16.gmra.mrb[0].mxu0 %v836
      %v875 = vpop.f32.mrb[0].mxu0
      %v876 = vadd.f32 %v766, %v875
      %v877 = vpop.f32.mrb[0].mxu0
      %v878 = vpop.f32.mrb[0].mxu0
      %v879 = vpop.f32.mrb[0].mxu0
      %880 = vdwg.mxu0
      %vm881 = vcmask 61440
      %v882 = vsel %vm881, %v876, -inf
      %883 = vmax.xlane.f32.xlu0 %v882
      %v884 = vpop.xlane.xlu0 %883
      %v885 = vsub.f32 %v876, %v884
      %v886 = vmul.f32 %v885, 1.442695
      %v887 = vpow.pop %v886
      %v888 = vsel %vm881, %v887, 0.0
      %889 = vadd.xlane.f32.xlu0 %v888
      %v890 = vpop.xlane.xlu0 %889
      %v891 = vrcp.pop %v890
      %v892 = vmul.f32 %v887, %v891
      %v893 = vpack.c.bf16 %v892, %v892
      %vm894 = vcmask 64512
      %v896 = vsel %vm894, %v893, 0
      %vm898 = vcmask 1043456
      %v899 = vsel %vm898, %v767, 0
      %901 = vmatprep.subr.bf16.mxu0 0
      %902 = vmatpush1.bf16.msra.mxu0 %v899
      %903 = vmatprep.subr.bf16.mxu0 0
      %904 = vmatpush1.bf16.msra.mxu0 0
      %905 = vmatprep.subr.bf16.mxu0 0
      %906 = vmatpush1.bf16.msra.mxu0 0
      %907 = vmatprep.subr.bf16.mxu0 0
      %908 = vmatpush1.bf16.msra.mxu0 0
      %909 = vmatprep.subr.bf16.mxu0 0
      %910 = vmatpush1.bf16.msra.mxu0 0
      %911 = vmatprep.subr.bf16.mxu0 0
      %912 = vmatpush1.bf16.msra.mxu0 0
      %913 = vmatprep.subr.bf16.mxu0 0
      %914 = vmatpush1.bf16.msra.mxu0 0
      %915 = vmatprep.subr.bf16.mxu0 0
      %916 = vmatpush1.bf16.msra.mxu0 0
      %917 = vmatprep.subr.bf16.mxu0 0
      %918 = vmatpush1.bf16.msra.mxu0 0
      %919 = vmatprep.subr.bf16.mxu0 0
      %920 = vmatpush1.bf16.msra.mxu0 0
      %921 = vmatprep.subr.bf16.mxu0 0
      %922 = vmatpush1.bf16.msra.mxu0 0
      %923 = vmatprep.subr.bf16.mxu0 0
      %924 = vmatpush1.bf16.msra.mxu0 0
      %925 = vmatprep.subr.bf16.mxu0 0
      %926 = vmatpush1.bf16.msra.mxu0 0
      %927 = vmatprep.subr.bf16.mxu0 0
      %928 = vmatpush1.bf16.msra.mxu0 0
      %929 = vmatprep.subr.bf16.mxu0 0
      %930 = vmatpush1.bf16.msra.mxu0 0
      %931 = vmatprep.subr.bf16.mxu0 0
      %932 = vmatpush1.bf16.msra.mxu0 0
      %933 = vmatprep.mubr.bf16.mxu0 0
      %934 = vmatmul.mubr.bf16.gmra.mrb[0].mxu0 %v896
      %v935 = vpop.f32.mrb[0].mxu0
      %v936 = vadd.f32 0.0, %v935
      %v937 = vpop.f32.mrb[0].mxu0
      %v938 = vpop.f32.mrb[0].mxu0
      %v939 = vpop.f32.mrb[0].mxu0
      %940 = vdwg.mxu0
      %v941 = vld [vmem:[%s10] sm:$0xf]
      %v942 = vld [vmem:[%s10 + $0x4] sm:$0xf]
      %v943 = vld [vmem:[%s10 + $0x8] sm:$0xf]
      %v944 = vld [vmem:[%s10 + $0xc] sm:$0xf]
      %v945 = vpack.c.bf16 %v936, %v936
      %v946 = vld [vmem:[%s11] sm:$0xf]
      %v947 = vld [vmem:[%s11 + $0x4] sm:$0xf]
      %v948 = vld [vmem:[%s11 + $0x8] sm:$0xf]
      %v949 = vld [vmem:[%s11 + $0xc] sm:$0xf]
      %v954 = vunpack.c.l.b16 %v946
      %v955 = vunpack.c.l.b16 %v947
      %v956 = vunpack.c.l.b16 %v948
      %v957 = vunpack.c.l.b16 %v949
      %v958 = vpack.c.b16 %v955, %v954
      %v959 = vpack.c.b16 %v957, %v956
      %v963 = vsel %vm700, %v945, 0
      %965 = vmatprep.subr.bf16.mxu0 0
      %966 = vmatpush1.bf16.msra.mxu0 %v958
      %967 = vmatprep.subr.bf16.mxu0 0
      %968 = vmatpush1.bf16.msra.mxu0 %v959
      %969 = vmatprep.subr.bf16.mxu0 0
      %970 = vmatpush1.bf16.msra.mxu0 0
      %971 = vmatprep.subr.bf16.mxu0 0
      %972 = vmatpush1.bf16.msra.mxu0 0
      %973 = vmatprep.subr.bf16.mxu0 0
      %974 = vmatpush1.bf16.msra.mxu0 0
      %975 = vmatprep.subr.bf16.mxu0 0
      %976 = vmatpush1.bf16.msra.mxu0 0
      %977 = vmatprep.subr.bf16.mxu0 0
      %978 = vmatpush1.bf16.msra.mxu0 0
      %979 = vmatprep.subr.bf16.mxu0 0
      %980 = vmatpush1.bf16.msra.mxu0 0
      %981 = vmatprep.subr.bf16.mxu0 0
      %982 = vmatpush1.bf16.msra.mxu0 0
      %983 = vmatprep.subr.bf16.mxu0 0
      %984 = vmatpush1.bf16.msra.mxu0 0
      %985 = vmatprep.subr.bf16.mxu0 0
      %986 = vmatpush1.bf16.msra.mxu0 0
      %987 = vmatprep.subr.bf16.mxu0 0
      %988 = vmatpush1.bf16.msra.mxu0 0
      %989 = vmatprep.subr.bf16.mxu0 0
      %990 = vmatpush1.bf16.msra.mxu0 0
      %991 = vmatprep.subr.bf16.mxu0 0
      %992 = vmatpush1.bf16.msra.mxu0 0
      %993 = vmatprep.subr.bf16.mxu0 0
      %994 = vmatpush1.bf16.msra.mxu0 0
      %995 = vmatprep.subr.bf16.mxu0 0
      %996 = vmatpush1.bf16.msra.mxu0 0
      %997 = vmatprep.mubr.bf16.mxu0 0
      %998 = vmatmul.mubr.bf16.gmra.mrb[0].mxu0 %v963
      %v999 = vpop.f32.mrb[0].mxu0
      %v1000 = vadd.f32 0.0, %v999
      %v1001 = vpop.f32.mrb[0].mxu0
      %v1002 = vpop.f32.mrb[0].mxu0
      %v1003 = vpop.f32.mrb[0].mxu0
      %1004 = vdwg.mxu0
      %v1009 = vunpack.c.l.b16 %v941
      %v1010 = vunpack.c.l.b16 %v942
      %v1011 = vunpack.c.l.b16 %v943
      %v1012 = vunpack.c.l.b16 %v944
      %v1013 = vpack.c.b16 %v1010, %v1009
      %v1014 = vpack.c.b16 %v1012, %v1011
      %1017 = vmatprep.subr.bf16.mxu0 0
      %1018 = vmatpush1.bf16.msra.mxu0 %v1013
      %1019 = vmatprep.subr.bf16.mxu0 0
      %1020 = vmatpush1.bf16.msra.mxu0 %v1014
      %1021 = vmatprep.subr.bf16.mxu0 0
      %1022 = vmatpush1.bf16.msra.mxu0 0
      %1023 = vmatprep.subr.bf16.mxu0 0
      %1024 = vmatpush1.bf16.msra.mxu0 0
      %1025 = vmatprep.subr.bf16.mxu0 0
      %1026 = vmatpush1.bf16.msra.mxu0 0
      %1027 = vmatprep.subr.bf16.mxu0 0
      %1028 = vmatpush1.bf16.msra.mxu0 0
      %1029 = vmatprep.subr.bf16.mxu0 0
      %1030 = vmatpush1.bf16.msra.mxu0 0
      %1031 = vmatprep.subr.bf16.mxu0 0
      %1032 = vmatpush1.bf16.msra.mxu0 0
      %1033 = vmatprep.subr.bf16.mxu0 0
      %1034 = vmatpush1.bf16.msra.mxu0 0
      %1035 = vmatprep.subr.bf16.mxu0 0
      %1036 = vmatpush1.bf16.msra.mxu0 0
      %1037 = vmatprep.subr.bf16.mxu0 0
      %1038 = vmatpush1.bf16.msra.mxu0 0
      %1039 = vmatprep.subr.bf16.mxu0 0
      %1040 = vmatpush1.bf16.msra.mxu0 0
      %1041 = vmatprep.subr.bf16.mxu0 0
      %1042 = vmatpush1.bf16.msra.mxu0 0
      %1043 = vmatprep.subr.bf16.mxu0 0
      %1044 = vmatpush1.bf16.msra.mxu0 0
      %1045 = vmatprep.subr.bf16.mxu0 0
      %1046 = vmatpush1.bf16.msra.mxu0 0
      %1047 = vmatprep.subr.bf16.mxu0 0
      %1048 = vmatpush1.bf16.msra.mxu0 0
      %1049 = vmatprep.mubr.bf16.mxu0 0
      %1050 = vmatmul.mubr.bf16.gmra.mrb[0].mxu0 %v836
      %v1051 = vpop.f32.mrb[0].mxu0
      %v1052 = vadd.f32 %v1000, %v1051
      %v1053 = vpop.f32.mrb[0].mxu0
      %v1054 = vpop.f32.mrb[0].mxu0
      %v1055 = vpop.f32.mrb[0].mxu0
      %1056 = vdwg.mxu0
      %v1057 = vlaneseq
      %v1058 = vshrl.u32 %v1057, 7
      %v1059 = vsub.s32 3, %v1058
      %v1060 = vrot.slane %v678, %v1059
      %v1061 = vadd.f32 %v1052, %v1060
      %v1062 = vtanh.pop %v1061
      %vm1063 = vcmask 258048
      %1064 = vst.msk [vmem:[%s658] sm:$0x1f] %vm1063, %v1062
      %1065 = vst.msk [vmem:[%s662] sm:$0x1f] %vm881, %v892
      %v1066 = vld [vmem:[%s650] sm:$0xf]
      %v1067 = vld [vmem:[%s7] sm:$0xf]
      %v1068 = vld [vmem:[%s7 + $0x4] sm:$0xf]
      %v1069 = vld [vmem:[%s7 + $0x8] sm:$0xf]
      %v1070 = vld [vmem:[%s7 + $0xc] sm:$0xf]
      %v1071 = vlaneseq
      %v1072 = vshrl.u32 %v1071, 7
      %v1073 = vsub.s32 1, %v1072
      %v1074 = vrot.slane %v678, %v1073
      %v1079 = vunpack.c.l.b16 %v1067
      %v1080 = vunpack.c.l.b16 %v1068
      %v1081 = vunpack.c.l.b16 %v1069
      %v1082 = vunpack.c.l.b16 %v1070
      %v1083 = vpack.c.b16 %v1080, %v1079
      %v1084 = vpack.c.b16 %v1082, %v1081
      %v1088 = vsel %vm700, %v1066, 0
      %1090 = vmatprep.subr.bf16.mxu0 0
      %1091 = vmatpush1.bf16.msra.mxu0 %v1083
      %1092 = vmatprep.subr.bf16.mxu0 0
      %1093 = vmatpush1.bf16.msra.mxu0 %v1084
      %1094 = vmatprep.subr.bf16.mxu0 0
      %1095 = vmatpush1.bf16.msra.mxu0 0
      %1096 = vmatprep.subr.bf16.mxu0 0
      %1097 = vmatpush1.bf16.msra.mxu0 0
      %1098 = vmatprep.subr.bf16.mxu0 0
      %1099 = vmatpush1.bf16.msra.mxu0 0
      %1100 = vmatprep.subr.bf16.mxu0 0
      %1101 = vmatpush1.bf16.msra.mxu0 0
      %1102 = vmatprep.subr.bf16.mxu0 0
      %1103 = vmatpush1.bf16.msra.mxu0 0
      %1104 = vmatprep.subr.bf16.mxu0 0
      %1105 = vmatpush1.bf16.msra.mxu0 0
      %1106 = vmatprep.subr.bf16.mxu0 0
      %1107 = vmatpush1.bf16.msra.mxu0 0
      %1108 = vmatprep.subr.bf16.mxu0 0
      %1109 = vmatpush1.bf16.msra.mxu0 0
      %1110 = vmatprep.subr.bf16.mxu0 0
      %1111 = vmatpush1.bf16.msra.mxu0 0
      %1112 = vmatprep.subr.bf16.mxu0 0
      %1113 = vmatpush1.bf16.msra.mxu0 0
      %1114 = vmatprep.subr.bf16.mxu0 0
      %1115 = vmatpush1.bf16.msra.mxu0 0
      %1116 = vmatprep.subr.bf16.mxu0 0
      %1117 = vmatpush1.bf16.msra.mxu0 0
      %1118 = vmatprep.subr.bf16.mxu0 0
      %1119 = vmatpush1.bf16.msra.mxu0 0
      %1120 = vmatprep.subr.bf16.mxu0 0
      %1121 = vmatpush1.bf16.msra.mxu0 0
      %1122 = vmatprep.mubr.bf16.mxu0 0
      %1123 = vmatmul.mubr.bf16.gmra.mrb[0].mxu0 %v1088
      %v1124 = vpop.f32.mrb[0].mxu0
      %v1125 = vadd.f32 %v1074, %v1124
      %v1126 = vpop.f32.mrb[0].mxu0
      %v1127 = vpop.f32.mrb[0].mxu0
      %v1128 = vpop.f32.mrb[0].mxu0
      %1129 = vdwg.mxu0
      %v1130 = vtanh.pop %v1125
      %v1131 = vstv %s677
      %vm1132 = vcmp.lt.s32.totalorder %v746, %v1131
      %v1133 = vsel %vm1132, 1, 0
      %v1134 = vcvt.s32.f32 %v1133
      %s1135 = scvt.s32.f32 %s677
      %v1136 = vstv %s1135
      %v1137 = vrcp.pop %v1136
      %v1138 = vmul.f32 %v1130, %v1134
      %v1139 = vsel %vm700, %v1138, 0.0
      %v1140 = vrot.slane %v1139, 4
      %v1141 = vadd.f32 %v1139, %v1140
      %v1142 = vrot.slane %v1141, 2
      %v1143 = vadd.f32 %v1141, %v1142
      %v1144 = vrot.slane %v1143, 1
      %v1145 = vadd.f32 %v1143, %v1144
      %v1146 = vmul.f32 %v1145, %v1137
      %vm1147 = vcmp.lt.s32.totalorder %v764, %v1131
      %v1148 = vsel %vm1147, 0.0, -1e+09
      %v1149 = vpack.c.bf16 %v1130, %v1130
      %v1150 = vld [vmem:[%s654] sm:$0x7]
      %v1151 = vld [vmem:[%s9] sm:$0xf]
      %v1152 = vld [vmem:[%s9 + $0x4] sm:$0xf]
      %v1153 = vld [vmem:[%s9 + $0x8] sm:$0xf]
      %v1154 = vld [vmem:[%s9 + $0xc] sm:$0xf]
      %v1159 = vunpack.c.l.b16 %v1151
      %v1160 = vunpack.c.l.b16 %v1152
      %v1161 = vunpack.c.l.b16 %v1153
      %v1162 = vunpack.c.l.b16 %v1154
      %v1163 = vpack.c.b16 %v1160, %v1159
      %v1164 = vpack.c.b16 %v1162, %v1161
      %v1168 = vsel %vm700, %v1150, 0
      %1170 = vmatprep.subr.bf16.mxu0 0
      %1171 = vmatpush1.bf16.msra.mxu0 %v1163
      %1172 = vmatprep.subr.bf16.mxu0 0
      %1173 = vmatpush1.bf16.msra.mxu0 %v1164
      %1174 = vmatprep.subr.bf16.mxu0 0
      %1175 = vmatpush1.bf16.msra.mxu0 0
      %1176 = vmatprep.subr.bf16.mxu0 0
      %1177 = vmatpush1.bf16.msra.mxu0 0
      %1178 = vmatprep.subr.bf16.mxu0 0
      %1179 = vmatpush1.bf16.msra.mxu0 0
      %1180 = vmatprep.subr.bf16.mxu0 0
      %1181 = vmatpush1.bf16.msra.mxu0 0
      %1182 = vmatprep.subr.bf16.mxu0 0
      %1183 = vmatpush1.bf16.msra.mxu0 0
      %1184 = vmatprep.subr.bf16.mxu0 0
      %1185 = vmatpush1.bf16.msra.mxu0 0
      %1186 = vmatprep.subr.bf16.mxu0 0
      %1187 = vmatpush1.bf16.msra.mxu0 0
      %1188 = vmatprep.subr.bf16.mxu0 0
      %1189 = vmatpush1.bf16.msra.mxu0 0
      %1190 = vmatprep.subr.bf16.mxu0 0
      %1191 = vmatpush1.bf16.msra.mxu0 0
      %1192 = vmatprep.subr.bf16.mxu0 0
      %1193 = vmatpush1.bf16.msra.mxu0 0
      %1194 = vmatprep.subr.bf16.mxu0 0
      %1195 = vmatpush1.bf16.msra.mxu0 0
      %1196 = vmatprep.subr.bf16.mxu0 0
      %1197 = vmatpush1.bf16.msra.mxu0 0
      %1198 = vmatprep.subr.bf16.mxu0 0
      %1199 = vmatpush1.bf16.msra.mxu0 0
      %1200 = vmatprep.subr.bf16.mxu0 0
      %1201 = vmatpush1.bf16.msra.mxu0 0
      %1202 = vmatprep.mubr.bf16.mxu0 0
      %1203 = vmatmul.mubr.bf16.gmra.mrb[0].mxu0 %v1168
      %v1204 = vpop.f32.mrb[0].mxu0
      %v1205 = vadd.f32 %v1146, %v1204
      %v1206 = vpop.f32.mrb[0].mxu0
      %v1207 = vpop.f32.mrb[0].mxu0
      %v1208 = vpop.f32.mrb[0].mxu0
      %1209 = vdwg.mxu0
      %v1210 = vlaneseq
      %v1211 = vshrl.u32 %v1210, 7
      %v1212 = vsub.s32 4, %v1211
      %v1213 = vrot.slane %v678, %v1212
      %v1214 = vadd.f32 %v1205, %v1213
      %v1215 = vtanh.pop %v1214
      %v1216 = vpack.c.bf16 %v1215, %v1215
      %v1218 = vsel %vm700, %v1216, 0
      %1220 = vmatprep.subr.bf16.mxu0 0
      %1221 = vmatpush1.bf16.xpose.msra.mxu0 %v839
      %1222 = vmatprep.subr.bf16.mxu0 0
      %1223 = vmatpush1.bf16.xpose.msra.mxu0 0
      %1224 = vmatprep.subr.bf16.mxu0 0
      %1225 = vmatpush1.bf16.xpose.msra.mxu0 0
      %1226 = vmatprep.subr.bf16.mxu0 0
      %1227 = vmatpush1.bf16.xpose.msra.mxu0 0
      %1228 = vmatprep.subr.bf16.mxu0 0
      %1229 = vmatpush1.bf16.xpose.msra.mxu0 0
      %1230 = vmatprep.subr.bf16.mxu0 0
      %1231 = vmatpush1.bf16.xpose.msra.mxu0 0
      %1232 = vmatprep.subr.bf16.mxu0 0
      %1233 = vmatpush1.bf16.xpose.msra.mxu0 0
      %1234 = vmatprep.subr.bf16.mxu0 0
      %1235 = vmatpush1.bf16.xpose.msra.mxu0 0
      %1236 = vmatprep.subr.bf16.mxu0 0
      %1237 = vmatpush1.bf16.xpose.msra.mxu0 0
      %1238 = vmatprep.subr.bf16.mxu0 0
      %1239 = vmatpush1.bf16.xpose.msra.mxu0 0
      %1240 = vmatprep.subr.bf16.mxu0 0
      %1241 = vmatpush1.bf16.xpose.msra.mxu0 0
      %1242 = vmatprep.subr.bf16.mxu0 0
      %1243 = vmatpush1.bf16.xpose.msra.mxu0 0
      %1244 = vmatprep.subr.bf16.mxu0 0
      %1245 = vmatpush1.bf16.xpose.msra.mxu0 0
      %1246 = vmatprep.subr.bf16.mxu0 0
      %1247 = vmatpush1.bf16.xpose.msra.mxu0 0
      %1248 = vmatprep.subr.bf16.mxu0 0
      %1249 = vmatpush1.bf16.xpose.msra.mxu0 0
      %1250 = vmatprep.subr.bf16.mxu0 0
      %1251 = vmatpush1.bf16.xpose.msra.mxu0 0
      %1252 = vmatprep.mubr.bf16.mxu0 0
      %1253 = vmatmul.mubr.bf16.gmra.mrb[0].mxu0 %v1218
      %v1254 = vpop.f32.mrb[0].mxu0
      %v1255 = vadd.f32 %v766, %v1254
      %v1256 = vpop.f32.mrb[0].mxu0
      %v1257 = vpop.f32.mrb[0].mxu0
      %v1258 = vpop.f32.mrb[0].mxu0
      %1259 = vdwg.mxu0
      %v1260 = vsel %vm881, %v1255, -inf
      %1261 = vmax.xlane.f32.xlu0 %v1260
      %v1262 = vpop.xlane.xlu0 %1261
      %v1263 = vsub.f32 %v1255, %v1262
      %v1264 = vmul.f32 %v1263, 1.442695
      %v1265 = vpow.pop %v1264
      %v1266 = vsel %vm881, %v1265, 0.0
      %1267 = vadd.xlane.f32.xlu0 %v1266
      %v1268 = vpop.xlane.xlu0 %1267
      %v1269 = vrcp.pop %v1268
      %v1270 = vmul.f32 %v1265, %v1269
      %v1271 = vpack.c.bf16 %v1270, %v1270
      %v1273 = vsel %vm894, %v1271, 0
      %1275 = vmatprep.subr.bf16.mxu0 0
      %1276 = vmatpush1.bf16.msra.mxu0 %v899
      %1277 = vmatprep.subr.bf16.mxu0 0
      %1278 = vmatpush1.bf16.msra.mxu0 0
      %1279 = vmatprep.subr.bf16.mxu0 0
      %1280 = vmatpush1.bf16.msra.mxu0 0
      %1281 = vmatprep.subr.bf16.mxu0 0
      %1282 = vmatpush1.bf16.msra.mxu0 0
      %1283 = vmatprep.subr.bf16.mxu0 0
      %1284 = vmatpush1.bf16.msra.mxu0 0
      %1285 = vmatprep.subr.bf16.mxu0 0
      %1286 = vmatpush1.bf16.msra.mxu0 0
      %1287 = vmatprep.subr.bf16.mxu0 0
      %1288 = vmatpush1.bf16.msra.mxu0 0
      %1289 = vmatprep.subr.bf16.mxu0 0
      %1290 = vmatpush1.bf16.msra.mxu0 0
      %1291 = vmatprep.subr.bf16.mxu0 0
      %1292 = vmatpush1.bf16.msra.mxu0 0
      %1293 = vmatprep.subr.bf16.mxu0 0
      %1294 = vmatpush1.bf16.msra.mxu0 0
      %1295 = vmatprep.subr.bf16.mxu0 0
      %1296 = vmatpush1.bf16.msra.mxu0 0
      %1297 = vmatprep.subr.bf16.mxu0 0
      %1298 = vmatpush1.bf16.msra.mxu0 0
      %1299 = vmatprep.subr.bf16.mxu0 0
      %1300 = vmatpush1.bf16.msra.mxu0 0
      %1301 = vmatprep.subr.bf16.mxu0 0
      %1302 = vmatpush1.bf16.msra.mxu0 0
      %1303 = vmatprep.subr.bf16.mxu0 0
      %1304 = vmatpush1.bf16.msra.mxu0 0
      %1305 = vmatprep.subr.bf16.mxu0 0
      %1306 = vmatpush1.bf16.msra.mxu0 0
      %1307 = vmatprep.mubr.bf16.mxu0 0
      %1308 = vmatmul.mubr.bf16.gmra.mrb[0].mxu0 %v1273
      %v1309 = vpop.f32.mrb[0].mxu0
      %v1310 = vadd.f32 0.0, %v1309
      %v1311 = vpop.f32.mrb[0].mxu0
      %v1312 = vpop.f32.mrb[0].mxu0
      %v1313 = vpop.f32.mrb[0].mxu0
      %1314 = vdwg.mxu0
      %v1316 = vsel %vm700, %v1149, 0
      %1318 = vmatprep.subr.bf16.mxu0 0
      %1319 = vmatpush1.bf16.xpose.msra.mxu0 %v1316
      %1320 = vmatprep.subr.bf16.mxu0 0
      %1321 = vmatpush1.bf16.xpose.msra.mxu0 0
      %1322 = vmatprep.subr.bf16.mxu0 0
      %1323 = vmatpush1.bf16.xpose.msra.mxu0 0
      %1324 = vmatprep.subr.bf16.mxu0 0
      %1325 = vmatpush1.bf16.xpose.msra.mxu0 0
      %1326 = vmatprep.subr.bf16.mxu0 0
      %1327 = vmatpush1.bf16.xpose.msra.mxu0 0
      %1328 = vmatprep.subr.bf16.mxu0 0
      %1329 = vmatpush1.bf16.xpose.msra.mxu0 0
      %1330 = vmatprep.subr.bf16.mxu0 0
      %1331 = vmatpush1.bf16.xpose.msra.mxu0 0
      %1332 = vmatprep.subr.bf16.mxu0 0
      %1333 = vmatpush1.bf16.xpose.msra.mxu0 0
      %1334 = vmatprep.subr.bf16.mxu0 0
      %1335 = vmatpush1.bf16.xpose.msra.mxu0 0
      %1336 = vmatprep.subr.bf16.mxu0 0
      %1337 = vmatpush1.bf16.xpose.msra.mxu0 0
      %1338 = vmatprep.subr.bf16.mxu0 0
      %1339 = vmatpush1.bf16.xpose.msra.mxu0 0
      %1340 = vmatprep.subr.bf16.mxu0 0
      %1341 = vmatpush1.bf16.xpose.msra.mxu0 0
      %1342 = vmatprep.subr.bf16.mxu0 0
      %1343 = vmatpush1.bf16.xpose.msra.mxu0 0
      %1344 = vmatprep.subr.bf16.mxu0 0
      %1345 = vmatpush1.bf16.xpose.msra.mxu0 0
      %1346 = vmatprep.subr.bf16.mxu0 0
      %1347 = vmatpush1.bf16.xpose.msra.mxu0 0
      %1348 = vmatprep.subr.bf16.mxu0 0
      %1349 = vmatpush1.bf16.xpose.msra.mxu0 0
      %1350 = vmatprep.mubr.bf16.mxu0 0
      %1351 = vmatmul.mubr.bf16.gmra.mrb[0].mxu0 %v1218
      %v1352 = vpop.f32.mrb[0].mxu0
      %v1353 = vadd.f32 %v1148, %v1352
      %v1354 = vpop.f32.mrb[0].mxu0
      %v1355 = vpop.f32.mrb[0].mxu0
      %v1356 = vpop.f32.mrb[0].mxu0
      %1357 = vdwg.mxu0
      %v1358 = vsel %vm881, %v1353, -inf
      %1359 = vmax.xlane.f32.xlu0 %v1358
      %v1360 = vpop.xlane.xlu0 %1359
      %v1361 = vsub.f32 %v1353, %v1360
      %v1362 = vmul.f32 %v1361, 1.442695
      %v1363 = vpow.pop %v1362
      %v1364 = vsel %vm881, %v1363, 0.0
      %1365 = vadd.xlane.f32.xlu0 %v1364
      %v1366 = vpop.xlane.xlu0 %1365
      %v1367 = vrcp.pop %v1366
      %v1368 = vmul.f32 %v1363, %v1367
      %v1369 = vpack.c.bf16 %v1368, %v1368
      %v1371 = vsel %vm894, %v1369, 0
      %v1373 = vsel %vm898, %v1149, 0
      %1375 = vmatprep.subr.bf16.mxu0 0
      %1376 = vmatpush1.bf16.msra.mxu0 %v1373
      %1377 = vmatprep.subr.bf16.mxu0 0
      %1378 = vmatpush1.bf16.msra.mxu0 0
      %1379 = vmatprep.subr.bf16.mxu0 0
      %1380 = vmatpush1.bf16.msra.mxu0 0
      %1381 = vmatprep.subr.bf16.mxu0 0
      %1382 = vmatpush1.bf16.msra.mxu0 0
      %1383 = vmatprep.subr.bf16.mxu0 0
      %1384 = vmatpush1.bf16.msra.mxu0 0
      %1385 = vmatprep.subr.bf16.mxu0 0
      %1386 = vmatpush1.bf16.msra.mxu0 0
      %1387 = vmatprep.subr.bf16.mxu0 0
      %1388 = vmatpush1.bf16.msra.mxu0 0
      %1389 = vmatprep.subr.bf16.mxu0 0
      %1390 = vmatpush1.bf16.msra.mxu0 0
      %1391 = vmatprep.subr.bf16.mxu0 0
      %1392 = vmatpush1.bf16.msra.mxu0 0
      %1393 = vmatprep.subr.bf16.mxu0 0
      %1394 = vmatpush1.bf16.msra.mxu0 0
      %1395 = vmatprep.subr.bf16.mxu0 0
      %1396 = vmatpush1.bf16.msra.mxu0 0
      %1397 = vmatprep.subr.bf16.mxu0 0
      %1398 = vmatpush1.bf16.msra.mxu0 0
      %1399 = vmatprep.subr.bf16.mxu0 0
      %1400 = vmatpush1.bf16.msra.mxu0 0
      %1401 = vmatprep.subr.bf16.mxu0 0
      %1402 = vmatpush1.bf16.msra.mxu0 0
      %1403 = vmatprep.subr.bf16.mxu0 0
      %1404 = vmatpush1.bf16.msra.mxu0 0
      %1405 = vmatprep.subr.bf16.mxu0 0
      %1406 = vmatpush1.bf16.msra.mxu0 0
      %1407 = vmatprep.mubr.bf16.mxu0 0
      %1408 = vmatmul.mubr.bf16.gmra.mrb[0].mxu0 %v1371
      %v1409 = vpop.f32.mrb[0].mxu0
      %v1410 = vadd.f32 0.0, %v1409
      %v1411 = vpop.f32.mrb[0].mxu0
      %v1412 = vpop.f32.mrb[0].mxu0
      %v1413 = vpop.f32.mrb[0].mxu0
      %1414 = vdwg.mxu0
      %v1415 = vld [vmem:[%s12] sm:$0xf]
      %v1416 = vld [vmem:[%s12 + $0x4] sm:$0xf]
      %v1417 = vld [vmem:[%s12 + $0x8] sm:$0xf]
      %v1418 = vld [vmem:[%s12 + $0xc] sm:$0xf]
      %v1419 = vpack.c.bf16 %v1310, %v1310
      %v1420 = vld [vmem:[%s13] sm:$0xf]
      %v1421 = vld [vmem:[%s13 + $0x4] sm:$0xf]
      %v1422 = vld [vmem:[%s13 + $0x8] sm:$0xf]
      %v1423 = vld [vmem:[%s13 + $0xc] sm:$0xf]
      %v1428 = vunpack.c.l.b16 %v1420
      %v1429 = vunpack.c.l.b16 %v1421
      %v1430 = vunpack.c.l.b16 %v1422
      %v1431 = vunpack.c.l.b16 %v1423
      %v1432 = vpack.c.b16 %v1429, %v1428
      %v1433 = vpack.c.b16 %v1431, %v1430
      %v1437 = vsel %vm700, %v1419, 0
      %1439 = vmatprep.subr.bf16.mxu0 0
      %1440 = vmatpush1.bf16.msra.mxu0 %v1432
      %1441 = vmatprep.subr.bf16.mxu0 0
      %1442 = vmatpush1.bf16.msra.mxu0 %v1433
      %1443 = vmatprep.subr.bf16.mxu0 0
      %1444 = vmatpush1.bf16.msra.mxu0 0
      %1445 = vmatprep.subr.bf16.mxu0 0
      %1446 = vmatpush1.bf16.msra.mxu0 0
      %1447 = vmatprep.subr.bf16.mxu0 0
      %1448 = vmatpush1.bf16.msra.mxu0 0
      %1449 = vmatprep.subr.bf16.mxu0 0
      %1450 = vmatpush1.bf16.msra.mxu0 0
      %1451 = vmatprep.subr.bf16.mxu0 0
      %1452 = vmatpush1.bf16.msra.mxu0 0
      %1453 = vmatprep.subr.bf16.mxu0 0
      %1454 = vmatpush1.bf16.msra.mxu0 0
      %1455 = vmatprep.subr.bf16.mxu0 0
      %1456 = vmatpush1.bf16.msra.mxu0 0
      %1457 = vmatprep.subr.bf16.mxu0 0
      %1458 = vmatpush1.bf16.msra.mxu0 0
      %1459 = vmatprep.subr.bf16.mxu0 0
      %1460 = vmatpush1.bf16.msra.mxu0 0
      %1461 = vmatprep.subr.bf16.mxu0 0
      %1462 = vmatpush1.bf16.msra.mxu0 0
      %1463 = vmatprep.subr.bf16.mxu0 0
      %1464 = vmatpush1.bf16.msra.mxu0 0
      %1465 = vmatprep.subr.bf16.mxu0 0
      %1466 = vmatpush1.bf16.msra.mxu0 0
      %1467 = vmatprep.subr.bf16.mxu0 0
      %1468 = vmatpush1.bf16.msra.mxu0 0
      %1469 = vmatprep.subr.bf16.mxu0 0
      %1470 = vmatpush1.bf16.msra.mxu0 0
      %1471 = vmatprep.mubr.bf16.mxu0 0
      %1472 = vmatmul.mubr.bf16.gmra.mrb[0].mxu0 %v1437
      %v1473 = vpop.f32.mrb[0].mxu0
      %v1474 = vadd.f32 0.0, %v1473
      %v1475 = vpop.f32.mrb[0].mxu0
      %v1476 = vpop.f32.mrb[0].mxu0
      %v1477 = vpop.f32.mrb[0].mxu0
      %1478 = vdwg.mxu0
      %v1483 = vunpack.c.l.b16 %v1415
      %v1484 = vunpack.c.l.b16 %v1416
      %v1485 = vunpack.c.l.b16 %v1417
      %v1486 = vunpack.c.l.b16 %v1418
      %v1487 = vpack.c.b16 %v1484, %v1483
      %v1488 = vpack.c.b16 %v1486, %v1485
      %1491 = vmatprep.subr.bf16.mxu0 0
      %1492 = vmatpush1.bf16.msra.mxu0 %v1487
      %1493 = vmatprep.subr.bf16.mxu0 0
      %1494 = vmatpush1.bf16.msra.mxu0 %v1488
      %1495 = vmatprep.subr.bf16.mxu0 0
      %1496 = vmatpush1.bf16.msra.mxu0 0
      %1497 = vmatprep.subr.bf16.mxu0 0
      %1498 = vmatpush1.bf16.msra.mxu0 0
      %1499 = vmatprep.subr.bf16.mxu0 0
      %1500 = vmatpush1.bf16.msra.mxu0 0
      %1501 = vmatprep.subr.bf16.mxu0 0
      %1502 = vmatpush1.bf16.msra.mxu0 0
      %1503 = vmatprep.subr.bf16.mxu0 0
      %1504 = vmatpush1.bf16.msra.mxu0 0
      %1505 = vmatprep.subr.bf16.mxu0 0
      %1506 = vmatpush1.bf16.msra.mxu0 0
      %1507 = vmatprep.subr.bf16.mxu0 0
      %1508 = vmatpush1.bf16.msra.mxu0 0
      %1509 = vmatprep.subr.bf16.mxu0 0
      %1510 = vmatpush1.bf16.msra.mxu0 0
      %1511 = vmatprep.subr.bf16.mxu0 0
      %1512 = vmatpush1.bf16.msra.mxu0 0
      %1513 = vmatprep.subr.bf16.mxu0 0
      %1514 = vmatpush1.bf16.msra.mxu0 0
      %1515 = vmatprep.subr.bf16.mxu0 0
      %1516 = vmatpush1.bf16.msra.mxu0 0
      %1517 = vmatprep.subr.bf16.mxu0 0
      %1518 = vmatpush1.bf16.msra.mxu0 0
      %1519 = vmatprep.subr.bf16.mxu0 0
      %1520 = vmatpush1.bf16.msra.mxu0 0
      %1521 = vmatprep.subr.bf16.mxu0 0
      %1522 = vmatpush1.bf16.msra.mxu0 0
      %1523 = vmatprep.mubr.bf16.mxu0 0
      %1524 = vmatmul.mubr.bf16.gmra.mrb[0].mxu0 %v1218
      %v1525 = vpop.f32.mrb[0].mxu0
      %v1526 = vadd.f32 %v1474, %v1525
      %v1527 = vpop.f32.mrb[0].mxu0
      %v1528 = vpop.f32.mrb[0].mxu0
      %v1529 = vpop.f32.mrb[0].mxu0
      %1530 = vdwg.mxu0
      %v1531 = vpack.c.bf16 %v1410, %v1410
      %v1532 = vld [vmem:[%s14] sm:$0xf]
      %v1533 = vld [vmem:[%s14 + $0x4] sm:$0xf]
      %v1534 = vld [vmem:[%s14 + $0x8] sm:$0xf]
      %v1535 = vld [vmem:[%s14 + $0xc] sm:$0xf]
      %v1540 = vunpack.c.l.b16 %v1532
      %v1541 = vunpack.c.l.b16 %v1533
      %v1542 = vunpack.c.l.b16 %v1534
      %v1543 = vunpack.c.l.b16 %v1535
      %v1544 = vpack.c.b16 %v1541, %v1540
      %v1545 = vpack.c.b16 %v1543, %v1542
      %v1549 = vsel %vm700, %v1531, 0
      %1551 = vmatprep.subr.bf16.mxu0 0
      %1552 = vmatpush1.bf16.msra.mxu0 %v1544
      %1553 = vmatprep.subr.bf16.mxu0 0
      %1554 = vmatpush1.bf16.msra.mxu0 %v1545
      %1555 = vmatprep.subr.bf16.mxu0 0
      %1556 = vmatpush1.bf16.msra.mxu0 0
      %1557 = vmatprep.subr.bf16.mxu0 0
      %1558 = vmatpush1.bf16.msra.mxu0 0
      %1559 = vmatprep.subr.bf16.mxu0 0
      %1560 = vmatpush1.bf16.msra.mxu0 0
      %1561 = vmatprep.subr.bf16.mxu0 0
      %1562 = vmatpush1.bf16.msra.mxu0 0
      %1563 = vmatprep.subr.bf16.mxu0 0
      %1564 = vmatpush1.bf16.msra.mxu0 0
      %1565 = vmatprep.subr.bf16.mxu0 0
      %1566 = vmatpush1.bf16.msra.mxu0 0
      %1567 = vmatprep.subr.bf16.mxu0 0
      %1568 = vmatpush1.bf16.msra.mxu0 0
      %1569 = vmatprep.subr.bf16.mxu0 0
      %1570 = vmatpush1.bf16.msra.mxu0 0
      %1571 = vmatprep.subr.bf16.mxu0 0
      %1572 = vmatpush1.bf16.msra.mxu0 0
      %1573 = vmatprep.subr.bf16.mxu0 0
      %1574 = vmatpush1.bf16.msra.mxu0 0
      %1575 = vmatprep.subr.bf16.mxu0 0
      %1576 = vmatpush1.bf16.msra.mxu0 0
      %1577 = vmatprep.subr.bf16.mxu0 0
      %1578 = vmatpush1.bf16.msra.mxu0 0
      %1579 = vmatprep.subr.bf16.mxu0 0
      %1580 = vmatpush1.bf16.msra.mxu0 0
      %1581 = vmatprep.subr.bf16.mxu0 0
      %1582 = vmatpush1.bf16.msra.mxu0 0
      %1583 = vmatprep.mubr.bf16.mxu0 0
      %1584 = vmatmul.mubr.bf16.gmra.mrb[0].mxu0 %v1549
      %v1585 = vpop.f32.mrb[0].mxu0
      %v1586 = vadd.f32 0.0, %v1585
      %v1587 = vpop.f32.mrb[0].mxu0
      %v1588 = vpop.f32.mrb[0].mxu0
      %v1589 = vpop.f32.mrb[0].mxu0
      %1590 = vdwg.mxu0
      %v1591 = vadd.f32 %v1526, %v1586
      %v1592 = vlaneseq
      %v1593 = vshrl.u32 %v1592, 7
      %v1594 = vsub.s32 5, %v1593
      %v1595 = vrot.slane %v678, %v1594
      %v1596 = vadd.f32 %v1591, %v1595
      %v1597 = vtanh.pop %v1596
      %1598 = vst.msk [vmem:[%s666] sm:$0x1f] %vm1063, %v1597
      %1599 = vst.msk [vmem:[%s670] sm:$0x1f] %vm881, %v1270
      %1600 = vst.msk [vmem:[%s674] sm:$0x1f] %vm881, %v1368
      %p1601 = scmp.lt.s32.totalorder %s42, 1
      %s1602 = scalar_select %p1601, %s42, 1
      %s1603 = smul.addr %s1602, 8
      %s1604 = scalar_lea.vmem %s16, %s1603
      %p1605 = scmp.lt.s32.totalorder %s42, 1
      %s1606 = scalar_select %p1605, %s42, 1
      %s1607 = smul.addr %s1606, 8
      %s1608 = scalar_lea.vmem %s17, %s1607
      %p1609 = scmp.lt.s32.totalorder %s42, 1
      %s1610 = scalar_select %p1609, %s42, 1
      %s1611 = smul.addr %s1610, 8
      %s1612 = scalar_lea.vmem %s18, %s1611
      %p1613 = scmp.lt.s32.totalorder %s42, 1
      %s1614 = scalar_select %p1613, %s42, 1
      %s1615 = smul.addr %s1614, 8
      %s1616 = scalar_lea.vmem %s19, %s1615
      %p1617 = scmp.lt.s32.totalorder %s42, 1
      %s1618 = scalar_select %p1617, %s42, 1
      %s1619 = smul.addr %s1618, 8
      %s1620 = scalar_lea.vmem %s20, %s1619
      // Predicated region
      $region77: #{joint_model_forward.1} parent=75 // pred_check
        %p1621 = pneg %p374
      $region78: #{joint_model_forward.1} parent=75 // pred_check_branch
        %1623 = sbr.rel (%p1621) target = $region80
      $region79: #{joint_model_forward.1} parent=75 // pred_region
        _
      $region80: #{joint_model_forward.1} parent=75 // pred_fallthru
        _
      // Predicated region
      $region81: #{joint_model_forward.1} parent=75 // pred_check
        %p1624 = pneg %p400
      $region82: #{joint_model_forward.1} parent=75 // pred_check_branch
        %1626 = sbr.rel (%p1624) target = $region84
      $region83: #{joint_model_forward.1} parent=75 // pred_region
        _
      $region84: #{joint_model_forward.1} parent=75 // pred_fallthru
        _
      // Predicated region
      $region85: #{joint_model_forward.1} parent=75 // pred_check
        %p1627 = pneg %p426
      $region86: #{joint_model_forward.1} parent=75 // pred_check_branch
        %1629 = sbr.rel (%p1627) target = $region88
      $region87: #{joint_model_forward.1} parent=75 // pred_region
        _
      $region88: #{joint_model_forward.1} parent=75 // pred_fallthru
        _
      // Predicated region
      $region89: #{joint_model_forward.1} parent=75 // pred_check
        %p1630 = pneg %p452
      $region90: #{joint_model_forward.1} parent=75 // pred_check_branch
        %1632 = sbr.rel (%p1630) target = $region92
      $region91: #{joint_model_forward.1} parent=75 // pred_region
        _
      $region92: #{joint_model_forward.1} parent=75 // pred_fallthru
        _
      // Predicated region
      $region93: #{joint_model_forward.1} parent=75 // pred_check
        %p1633 = pneg %p478
      $region94: #{joint_model_forward.1} parent=75 // pred_check_branch
        %1635 = sbr.rel (%p1633) target = $region96
      $region95: #{joint_model_forward.1} parent=75 // pred_region
        _
      $region96: #{joint_model_forward.1} parent=75 // pred_fallthru
        _
    $region76: #{joint_model_forward.1} parent=5 // pred_fallthru
      _
    %p1636 = scmp.le.s32.totalorder 2, %s37
    // Predicated region
    $region97: #{joint_model_forward.1} parent=5 // pred_check
      %p1637 = pneg %p1636
    $region98: #{joint_model_forward.1} parent=5 // pred_check_branch
      %1639 = sbr.rel (%p1637) target = $region100
    $region99: #{joint_model_forward.1} parent=5 // pred_region
      %s1640 = ssub.s32 %s37, 2
      // Predicated region
      $region101: #{joint_model_forward.1} parent=99 // pred_check
        %p1641 = pneg %p380
      $region102: #{joint_model_forward.1} parent=99 // pred_check_branch
        %1643 = sbr.rel (%p1641) target = $region104
      $region103: #{joint_model_forward.1} parent=99 // pred_region
        %p1644 = scmp.lt.s32.totalorder %s43, 1
        %s1645 = scalar_select %p1644, %s43, 1
        %s1646 = smul.addr %s1645, 8
        %s1647 = scalar_lea.vmem %s16, %s1646
      $region104: #{joint_model_forward.1} parent=99 // pred_fallthru
        _
      // Predicated region
      $region105: #{joint_model_forward.1} parent=99 // pred_check
        %p1648 = pneg %p406
      $region106: #{joint_model_forward.1} parent=99 // pred_check_branch
        %1650 = sbr.rel (%p1648) target = $region108
      $region107: #{joint_model_forward.1} parent=99 // pred_region
        %p1651 = scmp.lt.s32.totalorder %s43, 1
        %s1652 = scalar_select %p1651, %s43, 1
        %s1653 = smul.addr %s1652, 8
        %s1654 = scalar_lea.vmem %s17, %s1653
      $region108: #{joint_model_forward.1} parent=99 // pred_fallthru
        _
      // Predicated region
      $region109: #{joint_model_forward.1} parent=99 // pred_check
        %p1655 = pneg %p432
      $region110: #{joint_model_forward.1} parent=99 // pred_check_branch
        %1657 = sbr.rel (%p1655) target = $region112
      $region111: #{joint_model_forward.1} parent=99 // pred_region
        %p1658 = scmp.lt.s32.totalorder %s43, 1
        %s1659 = scalar_select %p1658, %s43, 1
        %s1660 = smul.addr %s1659, 8
        %s1661 = scalar_lea.vmem %s18, %s1660
      $region112: #{joint_model_forward.1} parent=99 // pred_fallthru
        _
      // Predicated region
      $region113: #{joint_model_forward.1} parent=99 // pred_check
        %p1662 = pneg %p458
      $region114: #{joint_model_forward.1} parent=99 // pred_check_branch
        %1664 = sbr.rel (%p1662) target = $region116
      $region115: #{joint_model_forward.1} parent=99 // pred_region
        %p1665 = scmp.lt.s32.totalorder %s43, 1
        %s1666 = scalar_select %p1665, %s43, 1
        %s1667 = smul.addr %s1666, 8
        %s1668 = scalar_lea.vmem %s19, %s1667
      $region116: #{joint_model_forward.1} parent=99 // pred_fallthru
        _
      // Predicated region
      $region117: #{joint_model_forward.1} parent=99 // pred_check
        %p1669 = pneg %p484
      $region118: #{joint_model_forward.1} parent=99 // pred_check_branch
        %1671 = sbr.rel (%p1669) target = $region120
      $region119: #{joint_model_forward.1} parent=99 // pred_region
        %p1672 = scmp.lt.s32.totalorder %s43, 1
        %s1673 = scalar_select %p1672, %s43, 1
        %s1674 = smul.addr %s1673, 8
        %s1675 = scalar_lea.vmem %s20, %s1674
      $region120: #{joint_model_forward.1} parent=99 // pred_fallthru
        _
    $region100: #{joint_model_forward.1} parent=5 // pred_fallthru
      _
  $region6: #{joint_model_forward.1} parent=0 // loop_footer
    %s41 = sadd.s32 1, %s37
  $region7: #{joint_model_forward.1} parent=0 // loop_footer_branch
    %36 = sbr.rel target = $region3
  $region8: #{joint_model_forward.1} parent=0 // loop_exit
    _

</llo_original>
